<compile_context>
chip_gen: v6e
topology: v6e:2x2x1
jax: 0.10.0
libtpu: 0.0.40
codegen_flags: <defaults>
</compile_context>

<pallas_src>
import functools

import jax
import jax.numpy as jnp
from jax.experimental import pallas as pl
from jax.experimental.pallas import tpu as pltpu


def _bilinear_matrix(out_size: int, in_size: int, pad_in: int) -> jnp.ndarray:
    """(out_size, pad_in) half-pixel-center bilinear matrix; columns >= in_size are zero."""
    x = (jnp.arange(out_size, dtype=jnp.float32) + 0.5) * (in_size / out_size) - 0.5
    x0 = jnp.floor(x)
    frac = x - x0
    i0 = jnp.clip(x0.astype(jnp.int32), 0, in_size - 1)
    i1 = jnp.clip(x0.astype(jnp.int32) + 1, 0, in_size - 1)
    cols = jnp.arange(pad_in, dtype=jnp.int32)[None, :]                        # (1, pad_in)
    w = ((cols == i0[:, None]).astype(jnp.float32) * (1.0 - frac)[:, None]
         + (cols == i1[:, None]).astype(jnp.float32) * frac[:, None])
    return w                                                                   # (out, pad_in)


@functools.lru_cache(maxsize=32)
def _resize_weights(S: int, H: int, W: int, H_pad: int, S_pad: int):
    """Cached bf16 separable bilinear weights: Wy (S, H_pad) and Wx^T (W, S_pad)."""
    wy = _bilinear_matrix(S, H, H_pad).astype(jnp.bfloat16)        # (S, H_pad), zero tail cols
    wxt = _bilinear_matrix(S, W, W).T                              # (W, S)
    if S_pad != S:
        wxt = jnp.pad(wxt, ((0, 0), (0, S_pad - S)))
    wxt = wxt.astype(jnp.bfloat16)                                 # (W, S_pad)
    return wy, wxt


def _resize_kernel(img_ref, wy_ref, wxt_ref, out_ref):
    # img_ref: (1, th, W) src-dtype   wy_ref: (S, th) bf16   wxt_ref: (W, col_w) bf16
    # out_ref: (1, S, col_w) f32, resident across the row-tile (reduction) grid axis.
    h = pl.program_id(2)

    @pl.when(h == 0)
    def _init():
        out_ref[...] = jnp.zeros_like(out_ref)

    x = img_ref[0]
    if jnp.issubdtype(img_ref.dtype, jnp.integer):
        # uint8 input: already 0..255 (to_pil_image keeps bytes as-is).
        img_q = x.astype(jnp.bfloat16)                                         # (th, W)
    else:
        # to_pil_image on float: floor(clip(x,0,1)*255) -> exact 0..255 ints (exact in bf16).
        img_q = jnp.floor(jnp.clip(x.astype(jnp.float32), 0.0, 1.0)
                          * 255.0).astype(jnp.bfloat16)                        # (th, W)

    # X-resize on the MXU, bf16 inputs, f32 accumulation: (th, W) @ (W, col_w).
    tmp = jnp.dot(img_q, wxt_ref[...], preferred_element_type=jnp.float32)

    # Partial Y-resize for this row tile, accumulated into the resident output block:
    # (S, th) @ (th, col_w).
    out_ref[0] += jnp.dot(wy_ref[...], tmp.astype(jnp.bfloat16),
                          preferred_element_type=jnp.float32)

    @pl.when(h == pl.num_programs(2) - 1)
    def _finalize():
        # ToTensor's /255, applied once per output block at writeback.
        out_ref[0] = out_ref[0] * (1.0 / 255.0)


def joint_base_transform(img: jnp.ndarray, boxes: jnp.ndarray, size: int = 512,
                         n_col: int | None = None):
    C, H, W = img.shape
    S = int(size)

    # Lane-dense output: pad the output lane dim to a multiple of 128, slice back if needed.
    S_pad = ((S + 127) // 128) * 128

    # Row tiling: small H is taken whole; larger H is zero-padded to a multiple of 256 so
    # th stays MXU-friendly (256 = v6e/v7x MXU tile) and per-step VMEM is bounded for any H.
    if H <= 256:
        th, H_pad = H, H
    else:
        th = 256
        H_pad = ((H + th - 1) // th) * th
    n_h = H_pad // th

    # Chip detection (best effort) for megacore split + VMEM cap.
    kind = ""
    try:
        kind = jax.devices()[0].device_kind.lower()
    except Exception:
        pass
    is_v7 = "v7" in kind

    # Parallel output-column split: only helps megacore (v7x) when channel count is odd.
    if n_col is None:
        n_col = 2 if (is_v7 and S_pad % 256 == 0 and C % 2 == 1) else 1
    col_w = S_pad // n_col

    wy, wxt = _resize_weights(S, H, W, H_pad, S_pad)

    if H_pad != H:
        img = jnp.pad(img, ((0, 0), (0, H_pad - H), (0, 0)))   # zero rows x zero Wy cols

    # Right-size the scoped VMEM limit from the real block footprint (double-buffered
    # img/wy/out, single-buffered constant wxt), leaving headroom; cap below physical.
    itemsize = jnp.dtype(img.dtype).itemsize
    img_blk = th * W * itemsize
    wy_blk = S * th * 2
    wxt_blk = W * col_w * 2
    out_blk = S * col_w * 4
    vmem_needed = 2 * img_blk + 2 * wy_blk + wxt_blk + 2 * out_blk
    vmem_cap = (48 << 20) if is_v7 else (96 << 20)
    vmem_limit = int(min(max(int(1.5 * vmem_needed) + (4 << 20), 32 << 20), vmem_cap))

    grid = (C, n_col, n_h)
    img_spec = pl.BlockSpec((1, th, W), lambda c, j, h: (c, h, 0))
    wy_spec = pl.BlockSpec((S, th), lambda c, j, h: (0, h))
    out_spec = pl.BlockSpec((1, S, col_w), lambda c, j, h: (c, 0, j))
    out_shape = jax.ShapeDtypeStruct((C, S, S_pad), jnp.float32)
    cparams = pltpu.CompilerParams(
        dimension_semantics=("parallel", "parallel", "arbitrary"),
        vmem_limit_bytes=vmem_limit,
    )

    def _run(single_buffer_wxt: bool):
        if single_buffer_wxt:
            wxt_spec = pl.BlockSpec((W, col_w), lambda c, j, h: (0, j),
                                    pipeline_mode=pl.Buffered(1))
        else:
            wxt_spec = pl.BlockSpec((W, col_w), lambda c, j, h: (0, j))
        return pl.pallas_call(
            _resize_kernel,
            out_shape=out_shape,
            grid=grid,
            in_specs=[img_spec, wy_spec, wxt_spec],
            out_specs=out_spec,
            compiler_params=cparams,
        )(img, wy, wxt)

    try:
        out_img = _run(True)       # constant wxt block single-buffered (saves W*col_w*2 VMEM)
    except Exception:
        out_img = _run(False)      # fallback: default double buffering

    if S_pad != S:
        out_img = out_img[:, :, :S]

    # Box scaling: trivial (N, 4) elementwise op -> plain XLA (a Pallas launch is pure
    # overhead).  original_size = (H, W) -> x_scale = S / W, y_scale = S / H.
    x_scale = S / W
    y_scale = S / H
    scale = jnp.array([x_scale, y_scale, x_scale, y_scale], dtype=jnp.float32)
    out_boxes = jnp.round(boxes.astype(jnp.float32) * scale)
    out_boxes = out_boxes.astype(jnp.int32).astype(boxes.dtype)   # (boxes*s).round().int()
    return out_img, out_boxes


if __name__ == "__main__":
    key = jax.random.PRNGKey(0)
    k_img, k_box = jax.random.split(key)

    C, H, W = 4, 16, 16
    SIZE = 128  # small, lane-dense (multiple of 128) stand-in for the default 512

    img = jax.random.uniform(k_img, (C, H, W), dtype=jnp.float32)          # CHW, [0,1]
    boxes = jax.random.uniform(k_box, (8, 4), dtype=jnp.float32) * 15.0    # (N, 4) pixels

    out_img, out_boxes = joint_base_transform(img, boxes, size=SIZE)
    jax.block_until_ready(out_img)
    jax.block_until_ready(out_boxes)

    assert out_img.shape == (C, SIZE, SIZE)
    assert out_img.dtype == jnp.float32
    assert bool(jnp.all(out_img >= -1e-3)) and bool(jnp.all(out_img <= 1.0 + 1e-3))
    assert out_boxes.shape == boxes.shape and out_boxes.dtype == boxes.dtype
    print("KERNEL_OK")
</pallas_src>

<mosaic_0001>
module attributes {stable_mosaic.version = 11 : i64} {
  func.func @_resize_kernel(%arg0: i32, %arg1: i32, %arg2: i32, %arg3: memref<1x16x16xf32, #tpu.memory_space<vmem>>, %arg4: memref<128x16xbf16, #tpu.memory_space<vmem>>, %arg5: memref<16x128xbf16, #tpu.memory_space<vmem>>, %arg6: memref<1x128x128xf32, #tpu.memory_space<vmem>>) attributes {dimension_semantics = [#tpu.dimension_semantics<parallel>, #tpu.dimension_semantics<parallel>, #tpu.dimension_semantics<arbitrary>], iteration_bounds = array<i64: 4, 1, 1>, scalar_prefetch = 0 : i64, scratch_operands = 0 : i64, tpu.core_type = #tpu.core_type<tc>, window_params = [{transform_indices = @transform_0, window_bounds = array<i64: 1, 16, 16>}, {transform_indices = @transform_1, window_bounds = array<i64: 128, 16>}, {pipeline_mode = #tpu.pipeline_mode<synchronous>, transform_indices = @transform_2, window_bounds = array<i64: 16, 128>}, {transform_indices = @transform_3, window_bounds = array<i64: 1, 128, 128>}]} {
    %c0_i32 = arith.constant 0 : i32
    %0 = arith.cmpi eq, %arg2, %c0_i32 : i32
    %1 = arith.extui %0 : i1 to i32
    %c0_i32_0 = arith.constant 0 : i32
    %2 = arith.cmpi ne, %1, %c0_i32_0 : i32
    scf.if %2 {
      %cst_19 = arith.constant 0.000000e+00 : f32
      %27 = vector.broadcast %cst_19 : f32 to vector<1x128x128xf32>
      %c0_20 = arith.constant 0 : index
      %c0_21 = arith.constant 0 : index
      %c0_22 = arith.constant 0 : index
      %28 = vector.load %arg6[%c0_20, %c0_21, %c0_22] : memref<1x128x128xf32, #tpu.memory_space<vmem>>, vector<1x128x128xf32>
      tpu.vector_store %arg6[%c0_20, %c0_21, %c0_22], %27 {strides = array<i32>} : memref<1x128x128xf32, #tpu.memory_space<vmem>>, vector<1x128x128xf32>,
    } else {
    }
    %c0 = arith.constant 0 : index
    %c0_1 = arith.constant 0 : index
    %c0_2 = arith.constant 0 : index
    %3 = vector.load %arg3[%c0, %c0_1, %c0_2] : memref<1x16x16xf32, #tpu.memory_space<vmem>>, vector<1x16x16xf32>
    %4 = vector.shape_cast %3 : vector<1x16x16xf32> to vector<16x16xf32>
    %cst = arith.constant 0.000000e+00 : f32
    %cst_3 = arith.constant 1.000000e+00 : f32
    %5 = vector.broadcast %cst : f32 to vector<16x16xf32>
    %6 = arith.maximumf %5, %4 : vector<16x16xf32>
    %7 = vector.broadcast %cst_3 : f32 to vector<16x16xf32>
    %8 = arith.minimumf %7, %6 : vector<16x16xf32>
    %cst_4 = arith.constant 2.550000e+02 : f32
    %9 = vector.broadcast %cst_4 : f32 to vector<16x16xf32>
    %10 = arith.mulf %8, %9 : vector<16x16xf32>
    %11 = math.floor %10 : vector<16x16xf32>
    %12 = arith.truncf %11 : vector<16x16xf32> to vector<16x16xbf16>
    %c0_5 = arith.constant 0 : index
    %c0_6 = arith.constant 0 : index
    %13 = vector.load %arg5[%c0_5, %c0_6] : memref<16x128xbf16, #tpu.memory_space<vmem>>, vector<16x128xbf16>
    %cst_7 = arith.constant dense<0.000000e+00> : vector<16x128xf32>
    %14 = tpu.matmul %12, %13, %cst_7 {dimension_numbers = #tpu.dot_dimension_numbers<[1], [0], [0], [1], [0, 0, 1, 1], [], []>} : vector<16x16xbf16>, vector<16x128xbf16>, vector<16x128xf32> -> vector<16x128xf32>
    %c0_8 = arith.constant 0 : index
    %c0_9 = arith.constant 0 : index
    %c0_10 = arith.constant 0 : index
    %15 = vector.load %arg6[%c0_8, %c0_9, %c0_10] : memref<1x128x128xf32, #tpu.memory_space<vmem>>, vector<1x128x128xf32>
    %16 = vector.shape_cast %15 : vector<1x128x128xf32> to vector<128x128xf32>
    %c0_11 = arith.constant 0 : index
    %c0_12 = arith.constant 0 : index
    %17 = vector.load %arg4[%c0_11, %c0_12] : memref<128x16xbf16, #tpu.memory_space<vmem>>, vector<128x16xbf16>
    %18 = arith.truncf %14 : vector<16x128xf32> to vector<16x128xbf16>
    %cst_13 = arith.constant dense<0.000000e+00> : vector<128x128xf32>
    %19 = tpu.matmul %17, %18, %cst_13 {dimension_numbers = #tpu.dot_dimension_numbers<[1], [0], [0], [1], [0, 0, 1, 1], [], []>} : vector<128x16xbf16>, vector<16x128xbf16>, vector<128x128xf32> -> vector<128x128xf32>
    %20 = arith.addf %16, %19 : vector<128x128xf32>
    %c0_14 = arith.constant 0 : index
    %c0_15 = arith.constant 0 : index
    %c0_16 = arith.constant 0 : index
    %21 = vector.load %arg6[%c0_14, %c0_15, %c0_16] : memref<1x128x128xf32, #tpu.memory_space<vmem>>, vector<1x128x128xf32>
    %22 = vector.shape_cast %21 : vector<1x128x128xf32> to vector<128x128xf32>
    %23 = vector.shape_cast %20 : vector<128x128xf32> to vector<1x128x128xf32>
    tpu.vector_store %arg6[%c0_14, %c0_15, %c0_16], %23 {strides = array<i32>} : memref<1x128x128xf32, #tpu.memory_space<vmem>>, vector<1x128x128xf32>,
    %c0_i32_17 = arith.constant 0 : i32
    %24 = arith.cmpi eq, %arg2, %c0_i32_17 : i32
    %25 = arith.extui %24 : i1 to i32
    %c0_i32_18 = arith.constant 0 : i32
    %26 = arith.cmpi ne, %25, %c0_i32_18 : i32
    scf.if %26 {
      %c0_19 = arith.constant 0 : index
      %c0_20 = arith.constant 0 : index
      %c0_21 = arith.constant 0 : index
      %27 = vector.load %arg6[%c0_19, %c0_20, %c0_21] : memref<1x128x128xf32, #tpu.memory_space<vmem>>, vector<1x128x128xf32>
      %28 = vector.shape_cast %27 : vector<1x128x128xf32> to vector<128x128xf32>
      %cst_22 = arith.constant 0.00392156886 : f32
      %29 = vector.broadcast %cst_22 : f32 to vector<128x128xf32>
      %30 = arith.mulf %28, %29 : vector<128x128xf32>
      %c0_23 = arith.constant 0 : index
      %c0_24 = arith.constant 0 : index
      %c0_25 = arith.constant 0 : index
      %31 = vector.load %arg6[%c0_23, %c0_24, %c0_25] : memref<1x128x128xf32, #tpu.memory_space<vmem>>, vector<1x128x128xf32>
      %32 = vector.shape_cast %31 : vector<1x128x128xf32> to vector<128x128xf32>
      %33 = vector.shape_cast %30 : vector<128x128xf32> to vector<1x128x128xf32>
      tpu.vector_store %arg6[%c0_23, %c0_24, %c0_25], %33 {strides = array<i32>} : memref<1x128x128xf32, #tpu.memory_space<vmem>>, vector<1x128x128xf32>,
    } else {
    }
    return
  }
  func.func @transform_0(%arg0: i32, %arg1: i32, %arg2: i32) -> (i32, i32, i32) {
    %c0_i32 = arith.constant 0 : i32
    %c0_i32_0 = arith.constant 0 : i32
    return %arg0, %arg2, %c0_i32 : i32, i32, i32
  }
  func.func @transform_1(%arg0: i32, %arg1: i32, %arg2: i32) -> (i32, i32) {
    %c0_i32 = arith.constant 0 : i32
    %c0_i32_0 = arith.constant 0 : i32
    return %c0_i32, %arg2 : i32, i32
  }
  func.func @transform_2(%arg0: i32, %arg1: i32, %arg2: i32) -> (i32, i32) {
    %c0_i32 = arith.constant 0 : i32
    %c0_i32_0 = arith.constant 0 : i32
    return %c0_i32, %arg1 : i32, i32
  }
  func.func @transform_3(%arg0: i32, %arg1: i32, %arg2: i32) -> (i32, i32, i32) {
    %c0_i32 = arith.constant 0 : i32
    %c0_i32_0 = arith.constant 0 : i32
    return %arg0, %c0_i32, %arg1 : i32, i32, i32
  }
}

module attributes {stable_mosaic.version = 11 : i64} {
  func.func @_resize_kernel(%arg0: i32, %arg1: i32, %arg2: i32, %arg3: memref<1x16x16xf32, #tpu.memory_space<vmem>>, %arg4: memref<128x16xbf16, #tpu.memory_space<vmem>>, %arg5: memref<16x128xbf16, #tpu.memory_space<vmem>>, %arg6: memref<1x128x128xf32, #tpu.memory_space<vmem>>) attributes {dimension_semantics = [#tpu.dimension_semantics<parallel>, #tpu.dimension_semantics<parallel>, #tpu.dimension_semantics<arbitrary>], iteration_bounds = array<i64: 4, 1, 1>, scalar_prefetch = 0 : i64, scratch_operands = 0 : i64, tpu.core_type = #tpu.core_type<tc>, window_params = [{transform_indices = @transform_0, window_bounds = array<i64: 1, 16, 16>}, {transform_indices = @transform_1, window_bounds = array<i64: 128, 16>}, {transform_indices = @transform_2, window_bounds = array<i64: 16, 128>}, {transform_indices = @transform_3, window_bounds = array<i64: 1, 128, 128>}]} {
    %c0_i32 = arith.constant 0 : i32
    %0 = arith.cmpi eq, %arg2, %c0_i32 : i32
    %1 = arith.extui %0 : i1 to i32
    %c0_i32_0 = arith.constant 0 : i32
    %2 = arith.cmpi ne, %1, %c0_i32_0 : i32
    scf.if %2 {
      %cst_19 = arith.constant 0.000000e+00 : f32
      %27 = vector.broadcast %cst_19 : f32 to vector<1x128x128xf32>
      %c0_20 = arith.constant 0 : index
      %c0_21 = arith.constant 0 : index
      %c0_22 = arith.constant 0 : index
      %28 = vector.load %arg6[%c0_20, %c0_21, %c0_22] : memref<1x128x128xf32, #tpu.memory_space<vmem>>, vector<1x128x128xf32>
      tpu.vector_store %arg6[%c0_20, %c0_21, %c0_22], %27 {strides = array<i32>} : memref<1x128x128xf32, #tpu.memory_space<vmem>>, vector<1x128x128xf32>,
    } else {
    }
    %c0 = arith.constant 0 : index
    %c0_1 = arith.constant 0 : index
    %c0_2 = arith.constant 0 : index
    %3 = vector.load %arg3[%c0, %c0_1, %c0_2] : memref<1x16x16xf32, #tpu.memory_space<vmem>>, vector<1x16x16xf32>
    %4 = vector.shape_cast %3 : vector<1x16x16xf32> to vector<16x16xf32>
    %cst = arith.constant 0.000000e+00 : f32
    %cst_3 = arith.constant 1.000000e+00 : f32
    %5 = vector.broadcast %cst : f32 to vector<16x16xf32>
    %6 = arith.maximumf %5, %4 : vector<16x16xf32>
    %7 = vector.broadcast %cst_3 : f32 to vector<16x16xf32>
    %8 = arith.minimumf %7, %6 : vector<16x16xf32>
    %cst_4 = arith.constant 2.550000e+02 : f32
    %9 = vector.broadcast %cst_4 : f32 to vector<16x16xf32>
    %10 = arith.mulf %8, %9 : vector<16x16xf32>
    %11 = math.floor %10 : vector<16x16xf32>
    %12 = arith.truncf %11 : vector<16x16xf32> to vector<16x16xbf16>
    %c0_5 = arith.constant 0 : index
    %c0_6 = arith.constant 0 : index
    %13 = vector.load %arg5[%c0_5, %c0_6] : memref<16x128xbf16, #tpu.memory_space<vmem>>, vector<16x128xbf16>
    %cst_7 = arith.constant dense<0.000000e+00> : vector<16x128xf32>
    %14 = tpu.matmul %12, %13, %cst_7 {dimension_numbers = #tpu.dot_dimension_numbers<[1], [0], [0], [1], [0, 0, 1, 1], [], []>} : vector<16x16xbf16>, vector<16x128xbf16>, vector<16x128xf32> -> vector<16x128xf32>
    %c0_8 = arith.constant 0 : index
    %c0_9 = arith.constant 0 : index
    %c0_10 = arith.constant 0 : index
    %15 = vector.load %arg6[%c0_8, %c0_9, %c0_10] : memref<1x128x128xf32, #tpu.memory_space<vmem>>, vector<1x128x128xf32>
    %16 = vector.shape_cast %15 : vector<1x128x128xf32> to vector<128x128xf32>
    %c0_11 = arith.constant 0 : index
    %c0_12 = arith.constant 0 : index
    %17 = vector.load %arg4[%c0_11, %c0_12] : memref<128x16xbf16, #tpu.memory_space<vmem>>, vector<128x16xbf16>
    %18 = arith.truncf %14 : vector<16x128xf32> to vector<16x128xbf16>
    %cst_13 = arith.constant dense<0.000000e+00> : vector<128x128xf32>
    %19 = tpu.matmul %17, %18, %cst_13 {dimension_numbers = #tpu.dot_dimension_numbers<[1], [0], [0], [1], [0, 0, 1, 1], [], []>} : vector<128x16xbf16>, vector<16x128xbf16>, vector<128x128xf32> -> vector<128x128xf32>
    %20 = arith.addf %16, %19 : vector<128x128xf32>
    %c0_14 = arith.constant 0 : index
    %c0_15 = arith.constant 0 : index
    %c0_16 = arith.constant 0 : index
    %21 = vector.load %arg6[%c0_14, %c0_15, %c0_16] : memref<1x128x128xf32, #tpu.memory_space<vmem>>, vector<1x128x128xf32>
    %22 = vector.shape_cast %21 : vector<1x128x128xf32> to vector<128x128xf32>
    %23 = vector.shape_cast %20 : vector<128x128xf32> to vector<1x128x128xf32>
    tpu.vector_store %arg6[%c0_14, %c0_15, %c0_16], %23 {strides = array<i32>} : memref<1x128x128xf32, #tpu.memory_space<vmem>>, vector<1x128x128xf32>,
    %c0_i32_17 = arith.constant 0 : i32
    %24 = arith.cmpi eq, %arg2, %c0_i32_17 : i32
    %25 = arith.extui %24 : i1 to i32
    %c0_i32_18 = arith.constant 0 : i32
    %26 = arith.cmpi ne, %25, %c0_i32_18 : i32
    scf.if %26 {
      %c0_19 = arith.constant 0 : index
      %c0_20 = arith.constant 0 : index
      %c0_21 = arith.constant 0 : index
      %27 = vector.load %arg6[%c0_19, %c0_20, %c0_21] : memref<1x128x128xf32, #tpu.memory_space<vmem>>, vector<1x128x128xf32>
      %28 = vector.shape_cast %27 : vector<1x128x128xf32> to vector<128x128xf32>
      %cst_22 = arith.constant 0.00392156886 : f32
      %29 = vector.broadcast %cst_22 : f32 to vector<128x128xf32>
      %30 = arith.mulf %28, %29 : vector<128x128xf32>
      %c0_23 = arith.constant 0 : index
      %c0_24 = arith.constant 0 : index
      %c0_25 = arith.constant 0 : index
      %31 = vector.load %arg6[%c0_23, %c0_24, %c0_25] : memref<1x128x128xf32, #tpu.memory_space<vmem>>, vector<1x128x128xf32>
      %32 = vector.shape_cast %31 : vector<1x128x128xf32> to vector<128x128xf32>
      %33 = vector.shape_cast %30 : vector<128x128xf32> to vector<1x128x128xf32>
      tpu.vector_store %arg6[%c0_23, %c0_24, %c0_25], %33 {strides = array<i32>} : memref<1x128x128xf32, #tpu.memory_space<vmem>>, vector<1x128x128xf32>,
    } else {
    }
    return
  }
  func.func @transform_0(%arg0: i32, %arg1: i32, %arg2: i32) -> (i32, i32, i32) {
    %c0_i32 = arith.constant 0 : i32
    %c0_i32_0 = arith.constant 0 : i32
    return %arg0, %arg2, %c0_i32 : i32, i32, i32
  }
  func.func @transform_1(%arg0: i32, %arg1: i32, %arg2: i32) -> (i32, i32) {
    %c0_i32 = arith.constant 0 : i32
    %c0_i32_0 = arith.constant 0 : i32
    return %c0_i32, %arg2 : i32, i32
  }
  func.func @transform_2(%arg0: i32, %arg1: i32, %arg2: i32) -> (i32, i32) {
    %c0_i32 = arith.constant 0 : i32
    %c0_i32_0 = arith.constant 0 : i32
    return %c0_i32, %arg1 : i32, i32
  }
  func.func @transform_3(%arg0: i32, %arg1: i32, %arg2: i32) -> (i32, i32, i32) {
    %c0_i32 = arith.constant 0 : i32
    %c0_i32_0 = arith.constant 0 : i32
    return %arg0, %c0_i32, %arg1 : i32, i32, i32
  }
}

</mosaic_0001>

<llo_original>
// kernel: tpu_custom_call.1
$region0: #{tpu_custom_call.1}
  #allocation0 [shape = 'u32[]', space=smem, size = 0x4, offset = 0x4, fixed_abs, tag = 'smem constant byte address 0x4 - core index']
  #allocation1 [shape = 'u32[144,128]{1,0:T(1,128)}', space=vmem, size = 0x12000, scoped, tag = 'internal scratch']
  %s0 = inlined_call_operand.vmem [shape: f32[4,16,16], index: 0, kind: input, shape index: {}]
  %s1 = inlined_call_operand.vmem [shape: bf16[128,16], index: 1, kind: input, shape index: {}]
  %s2 = inlined_call_operand.vmem [shape: bf16[16,128], index: 2, kind: input, shape index: {}]
  %s3 = inlined_call_operand.hbm [shape: f32[4,128,128], index: 3, kind: output, shape index: {}]
  %s4 = sld [smem:[#allocation0]]
  $region53: #{tpu_custom_call.1} parent=0
    _
  %s6 = ssub.s32 1, %s4
  %s7 = scalar_select 0, %s6, %s4
  $region1: #{tpu_custom_call.1} parent=0
    #allocation2 [shape = 'u8[131072]{0}', space=vmem, size = 0x20000, scoped, tag = 'output window, operand 0']
    #allocation3 [shape = 's32[2]{0}', space=sflag, size = 0x8, scoped, tag = 'scoped memory for tpu_custom_call.1']
    %8 = vsyncpa [#allocation3], 0
    %s9 = scalar_lea.sflag [#allocation3], 1
    %10 = vsyncpa %s9, 0
    loop: start=0, step=1, limit=6
    $region2: #{tpu_custom_call.1} parent=1 // loop_pre_header
      _
    $region3: #{tpu_custom_call.1} parent=1 // loop_header
      %s12 = sphi 0, %s16
      %p13 = scmp.ge.s32.totalorder %s12, 6
      %s19 = sphi 0, %s38
      %s20 = sphi 0, %s34
      %s21 = sphi 0, %s30
      %s22 = sphi 0, %s19
      %s23 = sphi 0, %s20
      %s24 = sphi 0, %s21
      %s25 = sphi 0, %s22
      %s26 = sphi 0, %s23
      %s27 = sphi 0, %s24
      %s43 = sphi 0, %s45
      %s46 = sphi 0, %s43
      %s47 = sphi 0, %s46
      %s63 = sphi 0, %s47
      %s69 = sphi 0, %s71
      %s72 = sphi 0, %s69
      %s73 = sphi 0, %s72
      %s89 = sphi 0, %s73
      %s95 = sphi 0, %s97
      %s98 = sphi 0, %s95
      %s99 = sphi 0, %s98
      %s115 = sphi 0, %s99
      %s123 = sphi 0, %s125
      %s126 = sphi 0, %s123
      %s127 = sphi 0, %s126
      %s143 = sphi 0, %s127
    $region4: #{tpu_custom_call.1} parent=1 // loop_header_branch
      %15 = sbr.rel (%p13) target = $region8
    $region5: #{tpu_custom_call.1} parent=1 // loop_body
      %s17 = ssub.s32 %s12, 1
      %s18 = ssub.s32 %s12, 2
      %s28 = sadd.s32 1, %s21
      %p29 = scmp.ge.s32.totalorder %s28, 1
      %s30 = scalar_select %p29, 0, %s28
      %s31 = sadd.s32 1, %s20
      %s32 = scalar_select %p29, %s31, %s20
      %p33 = scmp.ge.s32.totalorder %s32, 1
      %s34 = scalar_select %p33, 0, %s32
      %s35 = sadd.s32 1, %s19
      %s36 = scalar_select %p33, %s35, %s19
      %p37 = scmp.ge.s32.totalorder %s36, 4
      %s38 = scalar_select %p37, 0, %s36
      %s39 = ssub.s32 %s19, %s38
      %s40 = ssub.s32 %s21, %s30
      %s41 = sor.u32 %s39, %s40
      %p42 = scmp.eq.s32.totalorder %s41, 0
      %s44 = sadd.s32 %s43, 1
      %s45 = scalar_select %p42, %s43, %s44
      %p48 = pneg %p42
      %p49 = scmp.eq.s32.totalorder %s12, 3
      %p50 = por %p48, %p49
      %p51 = scmp.ne.s32.totalorder %s43, %s46
      %p52 = scmp.eq.s32.totalorder %s12, 0
      %p53 = por %p51, %p52
      %p54 = scmp.ne.s32.totalorder %s43, %s46
      %p55 = scmp.eq.s32.totalorder %s17, 3
      %p56 = por %p54, %p55
      %p57 = scmp.ne.s32.totalorder %s46, %s47
      %p58 = scmp.eq.s32.totalorder %s17, 0
      %p59 = por %p57, %p58
      %p60 = scmp.ne.s32.totalorder %s46, %s47
      %p61 = scmp.eq.s32.totalorder %s18, 3
      %p62 = por %p60, %p61
      %p64 = scmp.ne.s32.totalorder %s47, %s63
      %p65 = scmp.eq.s32.totalorder %s18, 0
      %p66 = por %p64, %p65
      %s67 = ssub.s32 %s21, %s30
      %p68 = scmp.eq.s32.totalorder %s67, 0
      %s70 = sadd.s32 %s69, 1
      %s71 = scalar_select %p68, %s69, %s70
      %p74 = pneg %p68
      %p75 = scmp.eq.s32.totalorder %s12, 3
      %p76 = por %p74, %p75
      %p77 = scmp.ne.s32.totalorder %s69, %s72
      %p78 = scmp.eq.s32.totalorder %s12, 0
      %p79 = por %p77, %p78
      %p80 = scmp.ne.s32.totalorder %s69, %s72
      %p81 = scmp.eq.s32.totalorder %s17, 3
      %p82 = por %p80, %p81
      %p83 = scmp.ne.s32.totalorder %s72, %s73
      %p84 = scmp.eq.s32.totalorder %s17, 0
      %p85 = por %p83, %p84
      %p86 = scmp.ne.s32.totalorder %s72, %s73
      %p87 = scmp.eq.s32.totalorder %s18, 3
      %p88 = por %p86, %p87
      %p90 = scmp.ne.s32.totalorder %s73, %s89
      %p91 = scmp.eq.s32.totalorder %s18, 0
      %p92 = por %p90, %p91
      %s93 = ssub.s32 %s20, %s34
      %p94 = scmp.eq.s32.totalorder %s93, 0
      %s96 = sadd.s32 %s95, 1
      %s97 = scalar_select %p94, %s95, %s96
      %p100 = pneg %p94
      %p101 = scmp.eq.s32.totalorder %s12, 3
      %p102 = por %p100, %p101
      %p103 = scmp.ne.s32.totalorder %s95, %s98
      %p104 = scmp.eq.s32.totalorder %s12, 0
      %p105 = por %p103, %p104
      %p106 = scmp.ne.s32.totalorder %s95, %s98
      %p107 = scmp.eq.s32.totalorder %s17, 3
      %p108 = por %p106, %p107
      %p109 = scmp.ne.s32.totalorder %s98, %s99
      %p110 = scmp.eq.s32.totalorder %s17, 0
      %p111 = por %p109, %p110
      %p112 = scmp.ne.s32.totalorder %s98, %s99
      %p113 = scmp.eq.s32.totalorder %s18, 3
      %p114 = por %p112, %p113
      %p116 = scmp.ne.s32.totalorder %s99, %s115
      %p117 = scmp.eq.s32.totalorder %s18, 0
      %p118 = por %p116, %p117
      %s119 = ssub.s32 %s19, %s38
      %s120 = ssub.s32 %s20, %s34
      %s121 = sor.u32 %s119, %s120
      %p122 = scmp.eq.s32.totalorder %s121, 0
      %s124 = sadd.s32 %s123, 1
      %s125 = scalar_select %p122, %s123, %s124
      %p128 = pneg %p122
      %p129 = scmp.eq.s32.totalorder %s12, 3
      %p130 = por %p128, %p129
      %p131 = scmp.ne.s32.totalorder %s123, %s126
      %p132 = scmp.eq.s32.totalorder %s12, 0
      %p133 = por %p131, %p132
      %p134 = scmp.ne.s32.totalorder %s123, %s126
      %p135 = scmp.eq.s32.totalorder %s17, 3
      %p136 = por %p134, %p135
      %p137 = scmp.ne.s32.totalorder %s126, %s127
      %p138 = scmp.eq.s32.totalorder %s17, 0
      %p139 = por %p137, %p138
      %p140 = scmp.ne.s32.totalorder %s126, %s127
      %p141 = scmp.eq.s32.totalorder %s18, 3
      %p142 = por %p140, %p141
      %p144 = scmp.ne.s32.totalorder %s127, %s143
      %p145 = scmp.eq.s32.totalorder %s18, 0
      %p146 = por %p144, %p145
      %p147 = scmp.le.s32.totalorder 1, %s12
      %p148 = scmp.lt.s32.totalorder %s12, 5
      %p149 = pnand %p147, %p148
      %p150 = pneg %p149
      // Predicated region
      $region9: #{tpu_custom_call.1} parent=5 // pred_check
        _
      $region10: #{tpu_custom_call.1} parent=5 // pred_check_branch
        %152 = sbr.rel (%p149) target = $region12
      $region11: #{tpu_custom_call.1} parent=5 // pred_region
        %s153 = ssub.s32 %s12, 1
        // Predicated region
        $region13: #{tpu_custom_call.1} parent=11 // pred_check
          %p154 = pneg %p85
        $region14: #{tpu_custom_call.1} parent=11 // pred_check_branch
          %156 = sbr.rel (%p154) target = $region16
        $region15: #{tpu_custom_call.1} parent=11 // pred_region
          %p157 = scmp.lt.s32.totalorder %s24, 0
          %s158 = scalar_select %p157, %s24, 0
          %s159 = smul.addr %s158, 4
          %s160 = scalar_lea.vmem %s1, %s159
        $region16: #{tpu_custom_call.1} parent=11 // pred_fallthru
          _
        // Predicated region
        $region17: #{tpu_custom_call.1} parent=11 // pred_check
          %p161 = pneg %p111
        $region18: #{tpu_custom_call.1} parent=11 // pred_check_branch
          %163 = sbr.rel (%p161) target = $region20
        $region19: #{tpu_custom_call.1} parent=11 // pred_region
          %p164 = scmp.lt.s32.totalorder %s23, 0
          %s165 = scalar_select %p164, %s23, 0
          %s166 = smul.addr %s165, 4
          %s167 = scalar_lea.vmem %s2, %s166
        $region20: #{tpu_custom_call.1} parent=11 // pred_fallthru
          _
      $region12: #{tpu_custom_call.1} parent=5 // pred_fallthru
        _
      %p168 = scmp.lt.s32.totalorder %s12, 4
      // Predicated region
      $region21: #{tpu_custom_call.1} parent=5 // pred_check
        %p169 = pneg %p168
      $region22: #{tpu_custom_call.1} parent=5 // pred_check_branch
        %171 = sbr.rel (%p169) target = $region24
      $region23: #{tpu_custom_call.1} parent=5 // pred_region
        // Predicated region
        $region25: #{tpu_custom_call.1} parent=23 // pred_check
          %p172 = pneg %p53
        $region26: #{tpu_custom_call.1} parent=23 // pred_check_branch
          %174 = sbr.rel (%p172) target = $region28
        $region27: #{tpu_custom_call.1} parent=23 // pred_region
          %s175 = smul.u32 2, %s21
          %p176 = scmp.lt.s32.totalorder %s19, 3
          %s177 = scalar_select %p176, %s19, 3
          %p178 = scmp.lt.s32.totalorder %s175, 1
          %s179 = scalar_select %p178, %s175, 1
          %s180 = smul.addr %s177, 2
          %s181 = sadd.s32 %s179, %s180
          %s182 = smul.addr %s181, 8
          %s183 = scalar_lea.vmem %s0, %s182
          %s184 = smul.u32 2, %s21
        $region28: #{tpu_custom_call.1} parent=23 // pred_fallthru
          _
      $region24: #{tpu_custom_call.1} parent=5 // pred_fallthru
        _
      %p185 = scmp.le.s32.totalorder 1, %s12
      %p186 = scmp.lt.s32.totalorder %s12, 5
      %p187 = pnand %p185, %p186
      %p188 = pneg %p187
      // Predicated region
      $region29: #{tpu_custom_call.1} parent=5 // pred_check
        _
      $region30: #{tpu_custom_call.1} parent=5 // pred_check_branch
        %190 = sbr.rel (%p187) target = $region32
      $region31: #{tpu_custom_call.1} parent=5 // pred_region
        %s191 = ssub.s32 %s12, 1
        %s192 = smul.u32 2, %s24
        %p193 = scmp.lt.s32.totalorder %s22, 3
        %s194 = scalar_select %p193, %s22, 3
        %p195 = scmp.lt.s32.totalorder %s192, 1
        %s196 = scalar_select %p195, %s192, 1
        %s197 = smul.addr %s194, 2
        %s198 = sadd.s32 %s196, %s197
        %s199 = smul.addr %s198, 8
        %s200 = scalar_lea.vmem %s0, %s199
        %p201 = pneg %p59
        %p202 = pneg %p56
        %p203 = scmp.lt.s32.totalorder %s24, 0
        %s204 = scalar_select %p203, %s24, 0
        %s205 = smul.addr %s204, 4
        %s206 = scalar_lea.vmem %s1, %s205
        %p207 = pneg %p85
        %p208 = pneg %p82
        %p209 = scmp.lt.s32.totalorder %s23, 0
        %s210 = scalar_select %p209, %s23, 0
        %s211 = smul.addr %s210, 4
        %s212 = scalar_lea.vmem %s2, %s211
        %p213 = pneg %p111
        %p214 = pneg %p108
        %p215 = pneg %p139
        %p216 = pneg %p136
        %s217 = sand.u32 %s126, 1
        %s218 = scalar_lea.sflag [#allocation3], %s217
        %s219 = sand.u32 %s126, 1
        %s220 = smul.addr %s219, 128
        %s221 = scalar_lea.vmem [#allocation2], %s220
        %s222 = smul.u32 2, %s24
        %p223 = scmp.lt.s32.totalorder %s22, 3
        %s224 = scalar_select %p223, %s22, 3
        %p225 = scmp.lt.s32.totalorder %s222, 1
        %s226 = scalar_select %p225, %s222, 1
        %s227 = smul.addr %s224, 2
        %s228 = sadd.s32 %s226, %s227
        %s229 = smul.addr %s228, 8
        %s230 = scalar_lea.vmem %s0, %s229
        %s231 = smul.u32 2, %s24
        %p232 = scmp.lt.s32.totalorder %s24, 0
        %s233 = scalar_select %p232, %s24, 0
        %s234 = smul.addr %s233, 4
        %s235 = scalar_lea.vmem %s1, %s234
        %p236 = scmp.lt.s32.totalorder %s23, 0
        %s237 = scalar_select %p236, %s23, 0
        %s238 = smul.addr %s237, 4
        %s239 = scalar_lea.vmem %s2, %s238
        %p241 = scmp.eq.s32.totalorder %s24, 0
        // Predicated region
        $region33: #{tpu_custom_call.1} parent=31 // pred_check
          %p242 = pneg %p241
        $region34: #{tpu_custom_call.1} parent=31 // pred_check_branch
          %244 = sbr.rel (%p242) target = $region36
        $region35: #{tpu_custom_call.1} parent=31 // pred_region
          %245 = vst [vmem:[%s221] sm:$0xff] 0.0
          %246 = vst [vmem:[%s221 + $0x8] sm:$0xff] 0.0
          %247 = vst [vmem:[%s221 + $0x10] sm:$0xff] 0.0
          %248 = vst [vmem:[%s221 + $0x18] sm:$0xff] 0.0
          %249 = vst [vmem:[%s221 + $0x20] sm:$0xff] 0.0
          %250 = vst [vmem:[%s221 + $0x28] sm:$0xff] 0.0
          %251 = vst [vmem:[%s221 + $0x30] sm:$0xff] 0.0
          %252 = vst [vmem:[%s221 + $0x38] sm:$0xff] 0.0
          %253 = vst [vmem:[%s221 + $0x40] sm:$0xff] 0.0
          %254 = vst [vmem:[%s221 + $0x48] sm:$0xff] 0.0
          %255 = vst [vmem:[%s221 + $0x50] sm:$0xff] 0.0
          %256 = vst [vmem:[%s221 + $0x58] sm:$0xff] 0.0
          %257 = vst [vmem:[%s221 + $0x60] sm:$0xff] 0.0
          %258 = vst [vmem:[%s221 + $0x68] sm:$0xff] 0.0
          %259 = vst [vmem:[%s221 + $0x70] sm:$0xff] 0.0
          %260 = vst [vmem:[%s221 + $0x78] sm:$0xff] 0.0
        $region36: #{tpu_custom_call.1} parent=31 // pred_fallthru
          _
        %v261 = vld [vmem:[%s230] sm:$0xff]
        %v262 = vld [vmem:[%s230 + $0x8] sm:$0xff]
        %v263 = vmax.f32 %v261, 0.0
        %v264 = vmax.f32 %v262, 0.0
        %v265 = vmin.f32 %v263, 1.0
        %v266 = vmin.f32 %v264, 1.0
        %v267 = vmul.f32 %v265, 255.0
        %v268 = vmul.f32 %v266, 255.0
        %v269 = vfloor.f32 %v267
        %v270 = vfloor.f32 %v268
        %v271 = vpack.c.bf16 %v270, %v269
        %v272 = vld [vmem:[%s239] sm:$0xf]
        %v273 = vld [vmem:[%s239 + $0x4] sm:$0xf]
        %v276 = vunpack.c.l.b16 %v272
        %v277 = vunpack.c.l.b16 %v273
        %v278 = vpack.c.b16 %v277, %v276
        %vm280 = vcmask 130048
        %v282 = vsel %vm280, %v271, 0
        %284 = vmatprep.subr.bf16.mxu0 0
        %285 = vmatpush1.bf16.msra.mxu0 0
        %286 = vmatprep.subr.bf16.mxu0 0
        %287 = vmatpush1.bf16.msra.mxu0 0
        %288 = vmatprep.subr.bf16.mxu0 0
        %289 = vmatpush1.bf16.msra.mxu0 0
        %290 = vmatprep.subr.bf16.mxu0 0
        %291 = vmatpush1.bf16.msra.mxu0 0
        %292 = vmatprep.subr.bf16.mxu0 0
        %293 = vmatpush1.bf16.msra.mxu0 0
        %294 = vmatprep.subr.bf16.mxu0 0
        %295 = vmatpush1.bf16.msra.mxu0 0
        %296 = vmatprep.subr.bf16.mxu0 0
        %297 = vmatpush1.bf16.msra.mxu0 0
        %298 = vmatprep.subr.bf16.mxu0 0
        %299 = vmatpush1.bf16.msra.mxu0 %v278
        %300 = vmatprep.subr.bf16.mxu0 0
        %301 = vmatpush2.bf16.msra.mxu0 0
        %302 = vmatprep.subr.bf16.mxu0 0
        %303 = vmatpush2.bf16.msra.mxu0 0
        %304 = vmatprep.subr.bf16.mxu0 0
        %305 = vmatpush2.bf16.msra.mxu0 0
        %306 = vmatprep.subr.bf16.mxu0 0
        %307 = vmatpush2.bf16.msra.mxu0 0
        %308 = vmatprep.subr.bf16.mxu0 0
        %309 = vmatpush2.bf16.msra.mxu0 0
        %310 = vmatprep.subr.bf16.mxu0 0
        %311 = vmatpush2.bf16.msra.mxu0 0
        %312 = vmatprep.subr.bf16.mxu0 0
        %313 = vmatpush2.bf16.msra.mxu0 0
        %314 = vmatprep.subr.bf16.mxu0 0
        %315 = vmatpush2.bf16.msra.mxu0 0
        %316 = vmatprep.mubr.bf16.mxu0 0
        %317 = vmatmul.mubr.bf16.gmra.mxu0 %v282
        %v318 = vpop.f32.mrf.mxu0
        %v319 = vadd.f32 0.0, %v318
        %v320 = vpop.f32.mrf.mxu0
        %v321 = vpop.f32.mrf.mxu0
        %v322 = vadd.f32 0.0, %v321
        %v323 = vpop.f32.mrf.mxu0
        %324 = vdwg.mxu0
        %v325 = vld [vmem:[%s221] sm:$0xff]
        %v326 = vld [vmem:[%s221 + $0x8] sm:$0xff]
        %v327 = vld [vmem:[%s221 + $0x10] sm:$0xff]
        %v328 = vld [vmem:[%s221 + $0x18] sm:$0xff]
        %v329 = vld [vmem:[%s221 + $0x20] sm:$0xff]
        %v330 = vld [vmem:[%s221 + $0x28] sm:$0xff]
        %v331 = vld [vmem:[%s221 + $0x30] sm:$0xff]
        %v332 = vld [vmem:[%s221 + $0x38] sm:$0xff]
        %v333 = vld [vmem:[%s221 + $0x40] sm:$0xff]
        %v334 = vld [vmem:[%s221 + $0x48] sm:$0xff]
        %v335 = vld [vmem:[%s221 + $0x50] sm:$0xff]
        %v336 = vld [vmem:[%s221 + $0x58] sm:$0xff]
        %v337 = vld [vmem:[%s221 + $0x60] sm:$0xff]
        %v338 = vld [vmem:[%s221 + $0x68] sm:$0xff]
        %v339 = vld [vmem:[%s221 + $0x70] sm:$0xff]
        %v340 = vld [vmem:[%s221 + $0x78] sm:$0xff]
        %v341 = vld [vmem:[%s235] sm:$0xf]
        %v342 = vld [vmem:[%s235 + $0x4] sm:$0xf]
        %v343 = vld [vmem:[%s235 + $0x8] sm:$0xf]
        %v344 = vld [vmem:[%s235 + $0xc] sm:$0xf]
        %v345 = vld [vmem:[%s235 + $0x10] sm:$0xf]
        %v346 = vld [vmem:[%s235 + $0x14] sm:$0xf]
        %v347 = vld [vmem:[%s235 + $0x18] sm:$0xf]
        %v348 = vld [vmem:[%s235 + $0x1c] sm:$0xf]
        %v349 = vld [vmem:[%s235 + $0x20] sm:$0xf]
        %v350 = vld [vmem:[%s235 + $0x24] sm:$0xf]
        %v351 = vld [vmem:[%s235 + $0x28] sm:$0xf]
        %v352 = vld [vmem:[%s235 + $0x2c] sm:$0xf]
        %v353 = vld [vmem:[%s235 + $0x30] sm:$0xf]
        %v354 = vld [vmem:[%s235 + $0x34] sm:$0xf]
        %v355 = vld [vmem:[%s235 + $0x38] sm:$0xf]
        %v356 = vld [vmem:[%s235 + $0x3c] sm:$0xf]
        %v357 = vpack.c.bf16 %v322, %v319
        %v374 = vunpack.c.l.b16 %v341
        %v375 = vunpack.c.l.b16 %v342
        %v376 = vunpack.c.l.b16 %v343
        %v377 = vunpack.c.l.b16 %v344
        %v378 = vunpack.c.l.b16 %v345
        %v379 = vunpack.c.l.b16 %v346
        %v380 = vunpack.c.l.b16 %v347
        %v381 = vunpack.c.l.b16 %v348
        %v382 = vunpack.c.l.b16 %v349
        %v383 = vunpack.c.l.b16 %v350
        %v384 = vunpack.c.l.b16 %v351
        %v385 = vunpack.c.l.b16 %v352
        %v386 = vunpack.c.l.b16 %v353
        %v387 = vunpack.c.l.b16 %v354
        %v388 = vunpack.c.l.b16 %v355
        %v389 = vunpack.c.l.b16 %v356
        %v390 = vpack.c.b16 %v375, %v374
        %v391 = vpack.c.b16 %v377, %v376
        %v392 = vpack.c.b16 %v379, %v378
        %v393 = vpack.c.b16 %v381, %v380
        %v394 = vpack.c.b16 %v383, %v382
        %v395 = vpack.c.b16 %v385, %v384
        %v396 = vpack.c.b16 %v387, %v386
        %v397 = vpack.c.b16 %v389, %v388
        %v399 = vsel %vm280, %v390, 0
        %v402 = vsel %vm280, %v391, 0
        %v405 = vsel %vm280, %v392, 0
        %v408 = vsel %vm280, %v393, 0
        %v411 = vsel %vm280, %v394, 0
        %v414 = vsel %vm280, %v395, 0
        %v417 = vsel %vm280, %v396, 0
        %v420 = vsel %vm280, %v397, 0
        %422 = vmatprep.subr.bf16.mxu0 0
        %423 = vmatpush1.bf16.msra.mxu0 0
        %424 = vmatprep.subr.bf16.mxu0 0
        %425 = vmatpush1.bf16.msra.mxu0 0
        %426 = vmatprep.subr.bf16.mxu0 0
        %427 = vmatpush1.bf16.msra.mxu0 0
        %428 = vmatprep.subr.bf16.mxu0 0
        %429 = vmatpush1.bf16.msra.mxu0 0
        %430 = vmatprep.subr.bf16.mxu0 0
        %431 = vmatpush1.bf16.msra.mxu0 0
        %432 = vmatprep.subr.bf16.mxu0 0
        %433 = vmatpush1.bf16.msra.mxu0 0
        %434 = vmatprep.subr.bf16.mxu0 0
        %435 = vmatpush1.bf16.msra.mxu0 0
        %436 = vmatprep.subr.bf16.mxu0 0
        %437 = vmatpush1.bf16.msra.mxu0 %v357
        %438 = vmatprep.subr.bf16.mxu0 0
        %439 = vmatpush2.bf16.msra.mxu0 0
        %440 = vmatprep.subr.bf16.mxu0 0
        %441 = vmatpush2.bf16.msra.mxu0 0
        %442 = vmatprep.subr.bf16.mxu0 0
        %443 = vmatpush2.bf16.msra.mxu0 0
        %444 = vmatprep.subr.bf16.mxu0 0
        %445 = vmatpush2.bf16.msra.mxu0 0
        %446 = vmatprep.subr.bf16.mxu0 0
        %447 = vmatpush2.bf16.msra.mxu0 0
        %448 = vmatprep.subr.bf16.mxu0 0
        %449 = vmatpush2.bf16.msra.mxu0 0
        %450 = vmatprep.subr.bf16.mxu0 0
        %451 = vmatpush2.bf16.msra.mxu0 0
        %452 = vmatprep.subr.bf16.mxu0 0
        %453 = vmatpush2.bf16.msra.mxu0 0
        %454 = vmatprep.mubr.bf16.mxu0 0
        %455 = vmatmul.mubr.bf16.gmra.mxu0 %v399
        %v456 = vpop.f32.mrf.mxu0
        %v457 = vadd.f32 0.0, %v456
        %v458 = vpop.f32.mrf.mxu0
        %v459 = vpop.f32.mrf.mxu0
        %v460 = vadd.f32 0.0, %v459
        %v461 = vpop.f32.mrf.mxu0
        %462 = vmatprep.mubr.bf16.mxu0 0
        %463 = vmatmul.mubr.bf16.gmra.mxu0 %v402
        %v464 = vpop.f32.mrf.mxu0
        %v465 = vadd.f32 0.0, %v464
        %v466 = vpop.f32.mrf.mxu0
        %v467 = vpop.f32.mrf.mxu0
        %v468 = vadd.f32 0.0, %v467
        %v469 = vpop.f32.mrf.mxu0
        %470 = vmatprep.mubr.bf16.mxu0 0
        %471 = vmatmul.mubr.bf16.gmra.mxu0 %v405
        %v472 = vpop.f32.mrf.mxu0
        %v473 = vadd.f32 0.0, %v472
        %v474 = vpop.f32.mrf.mxu0
        %v475 = vpop.f32.mrf.mxu0
        %v476 = vadd.f32 0.0, %v475
        %v477 = vpop.f32.mrf.mxu0
        %478 = vmatprep.mubr.bf16.mxu0 0
        %479 = vmatmul.mubr.bf16.gmra.mxu0 %v408
        %v480 = vpop.f32.mrf.mxu0
        %v481 = vadd.f32 0.0, %v480
        %v482 = vpop.f32.mrf.mxu0
        %v483 = vpop.f32.mrf.mxu0
        %v484 = vadd.f32 0.0, %v483
        %v485 = vpop.f32.mrf.mxu0
        %486 = vmatprep.mubr.bf16.mxu0 0
        %487 = vmatmul.mubr.bf16.gmra.mxu0 %v411
        %v488 = vpop.f32.mrf.mxu0
        %v489 = vadd.f32 0.0, %v488
        %v490 = vpop.f32.mrf.mxu0
        %v491 = vpop.f32.mrf.mxu0
        %v492 = vadd.f32 0.0, %v491
        %v493 = vpop.f32.mrf.mxu0
        %494 = vmatprep.mubr.bf16.mxu0 0
        %495 = vmatmul.mubr.bf16.gmra.mxu0 %v414
        %v496 = vpop.f32.mrf.mxu0
        %v497 = vadd.f32 0.0, %v496
        %v498 = vpop.f32.mrf.mxu0
        %v499 = vpop.f32.mrf.mxu0
        %v500 = vadd.f32 0.0, %v499
        %v501 = vpop.f32.mrf.mxu0
        %502 = vmatprep.mubr.bf16.mxu0 0
        %503 = vmatmul.mubr.bf16.gmra.mxu0 %v417
        %v504 = vpop.f32.mrf.mxu0
        %v505 = vadd.f32 0.0, %v504
        %v506 = vpop.f32.mrf.mxu0
        %v507 = vpop.f32.mrf.mxu0
        %v508 = vadd.f32 0.0, %v507
        %v509 = vpop.f32.mrf.mxu0
        %510 = vmatprep.mubr.bf16.mxu0 0
        %511 = vmatmul.mubr.bf16.gmra.mxu0 %v420
        %v512 = vpop.f32.mrf.mxu0
        %v513 = vadd.f32 0.0, %v512
        %v514 = vpop.f32.mrf.mxu0
        %v515 = vpop.f32.mrf.mxu0
        %v516 = vadd.f32 0.0, %v515
        %v517 = vpop.f32.mrf.mxu0
        %518 = vdwg.mxu0
        %v519 = vadd.f32 %v325, %v457
        %v520 = vadd.f32 %v326, %v460
        %v521 = vadd.f32 %v327, %v465
        %v522 = vadd.f32 %v328, %v468
        %v523 = vadd.f32 %v329, %v473
        %v524 = vadd.f32 %v330, %v476
        %v525 = vadd.f32 %v331, %v481
        %v526 = vadd.f32 %v332, %v484
        %v527 = vadd.f32 %v333, %v489
        %v528 = vadd.f32 %v334, %v492
        %v529 = vadd.f32 %v335, %v497
        %v530 = vadd.f32 %v336, %v500
        %v531 = vadd.f32 %v337, %v505
        %v532 = vadd.f32 %v338, %v508
        %v533 = vadd.f32 %v339, %v513
        %v534 = vadd.f32 %v340, %v516
        %535 = vst [vmem:[%s221] sm:$0xff] %v519
        %536 = vst [vmem:[%s221 + $0x8] sm:$0xff] %v520
        %537 = vst [vmem:[%s221 + $0x10] sm:$0xff] %v521
        %538 = vst [vmem:[%s221 + $0x18] sm:$0xff] %v522
        %539 = vst [vmem:[%s221 + $0x20] sm:$0xff] %v523
        %540 = vst [vmem:[%s221 + $0x28] sm:$0xff] %v524
        %541 = vst [vmem:[%s221 + $0x30] sm:$0xff] %v525
        %542 = vst [vmem:[%s221 + $0x38] sm:$0xff] %v526
        %543 = vst [vmem:[%s221 + $0x40] sm:$0xff] %v527
        %544 = vst [vmem:[%s221 + $0x48] sm:$0xff] %v528
        %545 = vst [vmem:[%s221 + $0x50] sm:$0xff] %v529
        %546 = vst [vmem:[%s221 + $0x58] sm:$0xff] %v530
        %547 = vst [vmem:[%s221 + $0x60] sm:$0xff] %v531
        %548 = vst [vmem:[%s221 + $0x68] sm:$0xff] %v532
        %549 = vst [vmem:[%s221 + $0x70] sm:$0xff] %v533
        %550 = vst [vmem:[%s221 + $0x78] sm:$0xff] %v534
        // Predicated region
        $region37: #{tpu_custom_call.1} parent=31 // pred_check
          %p551 = pneg %p241
        $region38: #{tpu_custom_call.1} parent=31 // pred_check_branch
          %553 = sbr.rel (%p551) target = $region40
        $region39: #{tpu_custom_call.1} parent=31 // pred_region
          %v554 = vld [vmem:[%s221] sm:$0xff]
          %v555 = vld [vmem:[%s221 + $0x8] sm:$0xff]
          %v556 = vld [vmem:[%s221 + $0x10] sm:$0xff]
          %v557 = vld [vmem:[%s221 + $0x18] sm:$0xff]
          %v558 = vld [vmem:[%s221 + $0x20] sm:$0xff]
          %v559 = vld [vmem:[%s221 + $0x28] sm:$0xff]
          %v560 = vld [vmem:[%s221 + $0x30] sm:$0xff]
          %v561 = vld [vmem:[%s221 + $0x38] sm:$0xff]
          %v562 = vld [vmem:[%s221 + $0x40] sm:$0xff]
          %v563 = vld [vmem:[%s221 + $0x48] sm:$0xff]
          %v564 = vld [vmem:[%s221 + $0x50] sm:$0xff]
          %v565 = vld [vmem:[%s221 + $0x58] sm:$0xff]
          %v566 = vld [vmem:[%s221 + $0x60] sm:$0xff]
          %v567 = vld [vmem:[%s221 + $0x68] sm:$0xff]
          %v568 = vld [vmem:[%s221 + $0x70] sm:$0xff]
          %v569 = vld [vmem:[%s221 + $0x78] sm:$0xff]
          %v570 = vmul.f32 %v554, 0.003921569
          %v571 = vmul.f32 %v555, 0.003921569
          %v572 = vmul.f32 %v556, 0.003921569
          %v573 = vmul.f32 %v557, 0.003921569
          %v574 = vmul.f32 %v558, 0.003921569
          %v575 = vmul.f32 %v559, 0.003921569
          %v576 = vmul.f32 %v560, 0.003921569
          %v577 = vmul.f32 %v561, 0.003921569
          %v578 = vmul.f32 %v562, 0.003921569
          %v579 = vmul.f32 %v563, 0.003921569
          %v580 = vmul.f32 %v564, 0.003921569
          %v581 = vmul.f32 %v565, 0.003921569
          %v582 = vmul.f32 %v566, 0.003921569
          %v583 = vmul.f32 %v567, 0.003921569
          %v584 = vmul.f32 %v568, 0.003921569
          %v585 = vmul.f32 %v569, 0.003921569
          %586 = vst [vmem:[%s221] sm:$0xff] %v570
          %587 = vst [vmem:[%s221 + $0x8] sm:$0xff] %v571
          %588 = vst [vmem:[%s221 + $0x10] sm:$0xff] %v572
          %589 = vst [vmem:[%s221 + $0x18] sm:$0xff] %v573
          %590 = vst [vmem:[%s221 + $0x20] sm:$0xff] %v574
          %591 = vst [vmem:[%s221 + $0x28] sm:$0xff] %v575
          %592 = vst [vmem:[%s221 + $0x30] sm:$0xff] %v576
          %593 = vst [vmem:[%s221 + $0x38] sm:$0xff] %v577
          %594 = vst [vmem:[%s221 + $0x40] sm:$0xff] %v578
          %595 = vst [vmem:[%s221 + $0x48] sm:$0xff] %v579
          %596 = vst [vmem:[%s221 + $0x50] sm:$0xff] %v580
          %597 = vst [vmem:[%s221 + $0x58] sm:$0xff] %v581
          %598 = vst [vmem:[%s221 + $0x60] sm:$0xff] %v582
          %599 = vst [vmem:[%s221 + $0x68] sm:$0xff] %v583
          %600 = vst [vmem:[%s221 + $0x70] sm:$0xff] %v584
          %601 = vst [vmem:[%s221 + $0x78] sm:$0xff] %v585
        $region40: #{tpu_custom_call.1} parent=31 // pred_fallthru
          _
        %s602 = sand.u32 %s126, 1
        %s603 = scalar_lea.sflag [#allocation3], %s602
        %s604 = sand.u32 %s126, 1
        %s605 = smul.addr %s604, 128
        %s606 = scalar_lea.vmem [#allocation2], %s605
        // Predicated region
        $region41: #{tpu_custom_call.1} parent=31 // pred_check
          %p607 = pneg %p136
        $region42: #{tpu_custom_call.1} parent=31 // pred_check_branch
          %609 = sbr.rel (%p607) target = $region44
        $region43: #{tpu_custom_call.1} parent=31 // pred_region
          %s611 = ssub.s32 2048, 2048
          %612 = vsyncadd %s603, %s611
          %s613 = smul.addr %s22, 16
          %s614 = sadd.s32 %s23, %s613
          %s615 = smul.addr %s614, 128
          %s616 = scalar_lea.hbm %s3, %s615
          %s617 = sshll.u32 %s606, 4
          %s618 = int_to_ptr.vmem [resolvable:$true] %s617
          %623 = dma.vmem_to_hbm [thread:$0]  %s618, 2048, %s616, %s603, 128, 128, 8
        $region44: #{tpu_custom_call.1} parent=31 // pred_fallthru
          _
      $region32: #{tpu_custom_call.1} parent=5 // pred_fallthru
        _
      %p624 = scmp.le.s32.totalorder 2, %s12
      // Predicated region
      $region45: #{tpu_custom_call.1} parent=5 // pred_check
        %p625 = pneg %p624
      $region46: #{tpu_custom_call.1} parent=5 // pred_check_branch
        %627 = sbr.rel (%p625) target = $region48
      $region47: #{tpu_custom_call.1} parent=5 // pred_region
        %s628 = ssub.s32 %s12, 2
        // Predicated region
        $region49: #{tpu_custom_call.1} parent=47 // pred_check
          %p629 = pneg %p142
        $region50: #{tpu_custom_call.1} parent=47 // pred_check_branch
          %631 = sbr.rel (%p629) target = $region52
        $region51: #{tpu_custom_call.1} parent=47 // pred_region
          %s632 = sand.u32 %s127, 1
          %s633 = scalar_lea.sflag [#allocation3], %s632
          %s634 = sand.u32 %s127, 1
          %s635 = smul.addr %s634, 128
          %s636 = scalar_lea.vmem [#allocation2], %s635
          %637 = dma.done %s633, 2048
        $region52: #{tpu_custom_call.1} parent=47 // pred_fallthru
          _
      $region48: #{tpu_custom_call.1} parent=5 // pred_fallthru
        _
    $region6: #{tpu_custom_call.1} parent=1 // loop_footer
      %s16 = sadd.s32 1, %s12
    $region7: #{tpu_custom_call.1} parent=1 // loop_footer_branch
      %11 = sbr.rel target = $region3
    $region8: #{tpu_custom_call.1} parent=1 // loop_exit
      _
    %638 = vsyncpa [#allocation3], 1
    %s639 = scalar_lea.sflag [#allocation3], 1
    %640 = vsyncpa %s639, 1

// kernel: tpu_custom_call.1
$region0: #{tpu_custom_call.1}
  #allocation0 [shape = 'u32[]', space=smem, size = 0x4, offset = 0x4, fixed_abs, tag = 'smem constant byte address 0x4 - core index']
  #allocation1 [shape = 'u32[144,128]{1,0:T(1,128)}', space=vmem, size = 0x12000, scoped, tag = 'internal scratch']
  %s0 = inlined_call_operand.vmem [shape: f32[4,16,16], index: 0, kind: input, shape index: {}]
  %s1 = inlined_call_operand.vmem [shape: bf16[128,16], index: 1, kind: input, shape index: {}]
  %s2 = inlined_call_operand.vmem [shape: bf16[16,128], index: 2, kind: input, shape index: {}]
  %s3 = inlined_call_operand.hbm [shape: f32[4,128,128], index: 3, kind: output, shape index: {}]
  %s4 = sld [smem:[#allocation0]]
  $region53: #{tpu_custom_call.1} parent=0
    _
  %s6 = ssub.s32 1, %s4
  %s7 = scalar_select 0, %s6, %s4
  $region1: #{tpu_custom_call.1} parent=0
    #allocation2 [shape = 'u8[131072]{0}', space=vmem, size = 0x20000, scoped, tag = 'output window, operand 0']
    #allocation3 [shape = 's32[2]{0}', space=sflag, size = 0x8, scoped, tag = 'scoped memory for tpu_custom_call.1']
    %8 = vsyncpa [#allocation3], 0
    %s9 = scalar_lea.sflag [#allocation3], 1
    %10 = vsyncpa %s9, 0
    loop: start=0, step=1, limit=6
    $region2: #{tpu_custom_call.1} parent=1 // loop_pre_header
      _
    $region3: #{tpu_custom_call.1} parent=1 // loop_header
      %s12 = sphi 0, %s16
      %p13 = scmp.ge.s32.totalorder %s12, 6
      %s19 = sphi 0, %s38
      %s20 = sphi 0, %s34
      %s21 = sphi 0, %s30
      %s22 = sphi 0, %s19
      %s23 = sphi 0, %s20
      %s24 = sphi 0, %s21
      %s25 = sphi 0, %s22
      %s26 = sphi 0, %s23
      %s27 = sphi 0, %s24
      %s43 = sphi 0, %s45
      %s46 = sphi 0, %s43
      %s47 = sphi 0, %s46
      %s63 = sphi 0, %s47
      %s69 = sphi 0, %s71
      %s72 = sphi 0, %s69
      %s73 = sphi 0, %s72
      %s89 = sphi 0, %s73
      %s95 = sphi 0, %s97
      %s98 = sphi 0, %s95
      %s99 = sphi 0, %s98
      %s115 = sphi 0, %s99
      %s123 = sphi 0, %s125
      %s126 = sphi 0, %s123
      %s127 = sphi 0, %s126
      %s143 = sphi 0, %s127
    $region4: #{tpu_custom_call.1} parent=1 // loop_header_branch
      %15 = sbr.rel (%p13) target = $region8
    $region5: #{tpu_custom_call.1} parent=1 // loop_body
      %s17 = ssub.s32 %s12, 1
      %s18 = ssub.s32 %s12, 2
      %s28 = sadd.s32 1, %s21
      %p29 = scmp.ge.s32.totalorder %s28, 1
      %s30 = scalar_select %p29, 0, %s28
      %s31 = sadd.s32 1, %s20
      %s32 = scalar_select %p29, %s31, %s20
      %p33 = scmp.ge.s32.totalorder %s32, 1
      %s34 = scalar_select %p33, 0, %s32
      %s35 = sadd.s32 1, %s19
      %s36 = scalar_select %p33, %s35, %s19
      %p37 = scmp.ge.s32.totalorder %s36, 4
      %s38 = scalar_select %p37, 0, %s36
      %s39 = ssub.s32 %s19, %s38
      %s40 = ssub.s32 %s21, %s30
      %s41 = sor.u32 %s39, %s40
      %p42 = scmp.eq.s32.totalorder %s41, 0
      %s44 = sadd.s32 %s43, 1
      %s45 = scalar_select %p42, %s43, %s44
      %p48 = pneg %p42
      %p49 = scmp.eq.s32.totalorder %s12, 3
      %p50 = por %p48, %p49
      %p51 = scmp.ne.s32.totalorder %s43, %s46
      %p52 = scmp.eq.s32.totalorder %s12, 0
      %p53 = por %p51, %p52
      %p54 = scmp.ne.s32.totalorder %s43, %s46
      %p55 = scmp.eq.s32.totalorder %s17, 3
      %p56 = por %p54, %p55
      %p57 = scmp.ne.s32.totalorder %s46, %s47
      %p58 = scmp.eq.s32.totalorder %s17, 0
      %p59 = por %p57, %p58
      %p60 = scmp.ne.s32.totalorder %s46, %s47
      %p61 = scmp.eq.s32.totalorder %s18, 3
      %p62 = por %p60, %p61
      %p64 = scmp.ne.s32.totalorder %s47, %s63
      %p65 = scmp.eq.s32.totalorder %s18, 0
      %p66 = por %p64, %p65
      %s67 = ssub.s32 %s21, %s30
      %p68 = scmp.eq.s32.totalorder %s67, 0
      %s70 = sadd.s32 %s69, 1
      %s71 = scalar_select %p68, %s69, %s70
      %p74 = pneg %p68
      %p75 = scmp.eq.s32.totalorder %s12, 3
      %p76 = por %p74, %p75
      %p77 = scmp.ne.s32.totalorder %s69, %s72
      %p78 = scmp.eq.s32.totalorder %s12, 0
      %p79 = por %p77, %p78
      %p80 = scmp.ne.s32.totalorder %s69, %s72
      %p81 = scmp.eq.s32.totalorder %s17, 3
      %p82 = por %p80, %p81
      %p83 = scmp.ne.s32.totalorder %s72, %s73
      %p84 = scmp.eq.s32.totalorder %s17, 0
      %p85 = por %p83, %p84
      %p86 = scmp.ne.s32.totalorder %s72, %s73
      %p87 = scmp.eq.s32.totalorder %s18, 3
      %p88 = por %p86, %p87
      %p90 = scmp.ne.s32.totalorder %s73, %s89
      %p91 = scmp.eq.s32.totalorder %s18, 0
      %p92 = por %p90, %p91
      %s93 = ssub.s32 %s20, %s34
      %p94 = scmp.eq.s32.totalorder %s93, 0
      %s96 = sadd.s32 %s95, 1
      %s97 = scalar_select %p94, %s95, %s96
      %p100 = pneg %p94
      %p101 = scmp.eq.s32.totalorder %s12, 3
      %p102 = por %p100, %p101
      %p103 = scmp.ne.s32.totalorder %s95, %s98
      %p104 = scmp.eq.s32.totalorder %s12, 0
      %p105 = por %p103, %p104
      %p106 = scmp.ne.s32.totalorder %s95, %s98
      %p107 = scmp.eq.s32.totalorder %s17, 3
      %p108 = por %p106, %p107
      %p109 = scmp.ne.s32.totalorder %s98, %s99
      %p110 = scmp.eq.s32.totalorder %s17, 0
      %p111 = por %p109, %p110
      %p112 = scmp.ne.s32.totalorder %s98, %s99
      %p113 = scmp.eq.s32.totalorder %s18, 3
      %p114 = por %p112, %p113
      %p116 = scmp.ne.s32.totalorder %s99, %s115
      %p117 = scmp.eq.s32.totalorder %s18, 0
      %p118 = por %p116, %p117
      %s119 = ssub.s32 %s19, %s38
      %s120 = ssub.s32 %s20, %s34
      %s121 = sor.u32 %s119, %s120
      %p122 = scmp.eq.s32.totalorder %s121, 0
      %s124 = sadd.s32 %s123, 1
      %s125 = scalar_select %p122, %s123, %s124
      %p128 = pneg %p122
      %p129 = scmp.eq.s32.totalorder %s12, 3
      %p130 = por %p128, %p129
      %p131 = scmp.ne.s32.totalorder %s123, %s126
      %p132 = scmp.eq.s32.totalorder %s12, 0
      %p133 = por %p131, %p132
      %p134 = scmp.ne.s32.totalorder %s123, %s126
      %p135 = scmp.eq.s32.totalorder %s17, 3
      %p136 = por %p134, %p135
      %p137 = scmp.ne.s32.totalorder %s126, %s127
      %p138 = scmp.eq.s32.totalorder %s17, 0
      %p139 = por %p137, %p138
      %p140 = scmp.ne.s32.totalorder %s126, %s127
      %p141 = scmp.eq.s32.totalorder %s18, 3
      %p142 = por %p140, %p141
      %p144 = scmp.ne.s32.totalorder %s127, %s143
      %p145 = scmp.eq.s32.totalorder %s18, 0
      %p146 = por %p144, %p145
      %p147 = scmp.le.s32.totalorder 1, %s12
      %p148 = scmp.lt.s32.totalorder %s12, 5
      %p149 = pnand %p147, %p148
      %p150 = pneg %p149
      // Predicated region
      $region9: #{tpu_custom_call.1} parent=5 // pred_check
        _
      $region10: #{tpu_custom_call.1} parent=5 // pred_check_branch
        %152 = sbr.rel (%p149) target = $region12
      $region11: #{tpu_custom_call.1} parent=5 // pred_region
        %s153 = ssub.s32 %s12, 1
        // Predicated region
        $region13: #{tpu_custom_call.1} parent=11 // pred_check
          %p154 = pneg %p85
        $region14: #{tpu_custom_call.1} parent=11 // pred_check_branch
          %156 = sbr.rel (%p154) target = $region16
        $region15: #{tpu_custom_call.1} parent=11 // pred_region
          %p157 = scmp.lt.s32.totalorder %s24, 0
          %s158 = scalar_select %p157, %s24, 0
          %s159 = smul.addr %s158, 4
          %s160 = scalar_lea.vmem %s1, %s159
        $region16: #{tpu_custom_call.1} parent=11 // pred_fallthru
          _
        // Predicated region
        $region17: #{tpu_custom_call.1} parent=11 // pred_check
          %p161 = pneg %p111
        $region18: #{tpu_custom_call.1} parent=11 // pred_check_branch
          %163 = sbr.rel (%p161) target = $region20
        $region19: #{tpu_custom_call.1} parent=11 // pred_region
          %p164 = scmp.lt.s32.totalorder %s23, 0
          %s165 = scalar_select %p164, %s23, 0
          %s166 = smul.addr %s165, 4
          %s167 = scalar_lea.vmem %s2, %s166
        $region20: #{tpu_custom_call.1} parent=11 // pred_fallthru
          _
      $region12: #{tpu_custom_call.1} parent=5 // pred_fallthru
        _
      %p168 = scmp.lt.s32.totalorder %s12, 4
      // Predicated region
      $region21: #{tpu_custom_call.1} parent=5 // pred_check
        %p169 = pneg %p168
      $region22: #{tpu_custom_call.1} parent=5 // pred_check_branch
        %171 = sbr.rel (%p169) target = $region24
      $region23: #{tpu_custom_call.1} parent=5 // pred_region
        // Predicated region
        $region25: #{tpu_custom_call.1} parent=23 // pred_check
          %p172 = pneg %p53
        $region26: #{tpu_custom_call.1} parent=23 // pred_check_branch
          %174 = sbr.rel (%p172) target = $region28
        $region27: #{tpu_custom_call.1} parent=23 // pred_region
          %s175 = smul.u32 2, %s21
          %p176 = scmp.lt.s32.totalorder %s19, 3
          %s177 = scalar_select %p176, %s19, 3
          %p178 = scmp.lt.s32.totalorder %s175, 1
          %s179 = scalar_select %p178, %s175, 1
          %s180 = smul.addr %s177, 2
          %s181 = sadd.s32 %s179, %s180
          %s182 = smul.addr %s181, 8
          %s183 = scalar_lea.vmem %s0, %s182
          %s184 = smul.u32 2, %s21
        $region28: #{tpu_custom_call.1} parent=23 // pred_fallthru
          _
      $region24: #{tpu_custom_call.1} parent=5 // pred_fallthru
        _
      %p185 = scmp.le.s32.totalorder 1, %s12
      %p186 = scmp.lt.s32.totalorder %s12, 5
      %p187 = pnand %p185, %p186
      %p188 = pneg %p187
      // Predicated region
      $region29: #{tpu_custom_call.1} parent=5 // pred_check
        _
      $region30: #{tpu_custom_call.1} parent=5 // pred_check_branch
        %190 = sbr.rel (%p187) target = $region32
      $region31: #{tpu_custom_call.1} parent=5 // pred_region
        %s191 = ssub.s32 %s12, 1
        %s192 = smul.u32 2, %s24
        %p193 = scmp.lt.s32.totalorder %s22, 3
        %s194 = scalar_select %p193, %s22, 3
        %p195 = scmp.lt.s32.totalorder %s192, 1
        %s196 = scalar_select %p195, %s192, 1
        %s197 = smul.addr %s194, 2
        %s198 = sadd.s32 %s196, %s197
        %s199 = smul.addr %s198, 8
        %s200 = scalar_lea.vmem %s0, %s199
        %p201 = pneg %p59
        %p202 = pneg %p56
        %p203 = scmp.lt.s32.totalorder %s24, 0
        %s204 = scalar_select %p203, %s24, 0
        %s205 = smul.addr %s204, 4
        %s206 = scalar_lea.vmem %s1, %s205
        %p207 = pneg %p85
        %p208 = pneg %p82
        %p209 = scmp.lt.s32.totalorder %s23, 0
        %s210 = scalar_select %p209, %s23, 0
        %s211 = smul.addr %s210, 4
        %s212 = scalar_lea.vmem %s2, %s211
        %p213 = pneg %p111
        %p214 = pneg %p108
        %p215 = pneg %p139
        %p216 = pneg %p136
        %s217 = sand.u32 %s126, 1
        %s218 = scalar_lea.sflag [#allocation3], %s217
        %s219 = sand.u32 %s126, 1
        %s220 = smul.addr %s219, 128
        %s221 = scalar_lea.vmem [#allocation2], %s220
        %s222 = smul.u32 2, %s24
        %p223 = scmp.lt.s32.totalorder %s22, 3
        %s224 = scalar_select %p223, %s22, 3
        %p225 = scmp.lt.s32.totalorder %s222, 1
        %s226 = scalar_select %p225, %s222, 1
        %s227 = smul.addr %s224, 2
        %s228 = sadd.s32 %s226, %s227
        %s229 = smul.addr %s228, 8
        %s230 = scalar_lea.vmem %s0, %s229
        %s231 = smul.u32 2, %s24
        %p232 = scmp.lt.s32.totalorder %s24, 0
        %s233 = scalar_select %p232, %s24, 0
        %s234 = smul.addr %s233, 4
        %s235 = scalar_lea.vmem %s1, %s234
        %p236 = scmp.lt.s32.totalorder %s23, 0
        %s237 = scalar_select %p236, %s23, 0
        %s238 = smul.addr %s237, 4
        %s239 = scalar_lea.vmem %s2, %s238
        %p241 = scmp.eq.s32.totalorder %s24, 0
        // Predicated region
        $region33: #{tpu_custom_call.1} parent=31 // pred_check
          %p242 = pneg %p241
        $region34: #{tpu_custom_call.1} parent=31 // pred_check_branch
          %244 = sbr.rel (%p242) target = $region36
        $region35: #{tpu_custom_call.1} parent=31 // pred_region
          %245 = vst [vmem:[%s221] sm:$0xff] 0.0
          %246 = vst [vmem:[%s221 + $0x8] sm:$0xff] 0.0
          %247 = vst [vmem:[%s221 + $0x10] sm:$0xff] 0.0
          %248 = vst [vmem:[%s221 + $0x18] sm:$0xff] 0.0
          %249 = vst [vmem:[%s221 + $0x20] sm:$0xff] 0.0
          %250 = vst [vmem:[%s221 + $0x28] sm:$0xff] 0.0
          %251 = vst [vmem:[%s221 + $0x30] sm:$0xff] 0.0
          %252 = vst [vmem:[%s221 + $0x38] sm:$0xff] 0.0
          %253 = vst [vmem:[%s221 + $0x40] sm:$0xff] 0.0
          %254 = vst [vmem:[%s221 + $0x48] sm:$0xff] 0.0
          %255 = vst [vmem:[%s221 + $0x50] sm:$0xff] 0.0
          %256 = vst [vmem:[%s221 + $0x58] sm:$0xff] 0.0
          %257 = vst [vmem:[%s221 + $0x60] sm:$0xff] 0.0
          %258 = vst [vmem:[%s221 + $0x68] sm:$0xff] 0.0
          %259 = vst [vmem:[%s221 + $0x70] sm:$0xff] 0.0
          %260 = vst [vmem:[%s221 + $0x78] sm:$0xff] 0.0
        $region36: #{tpu_custom_call.1} parent=31 // pred_fallthru
          _
        %v261 = vld [vmem:[%s230] sm:$0xff]
        %v262 = vld [vmem:[%s230 + $0x8] sm:$0xff]
        %v263 = vmax.f32 %v261, 0.0
        %v264 = vmax.f32 %v262, 0.0
        %v265 = vmin.f32 %v263, 1.0
        %v266 = vmin.f32 %v264, 1.0
        %v267 = vmul.f32 %v265, 255.0
        %v268 = vmul.f32 %v266, 255.0
        %v269 = vfloor.f32 %v267
        %v270 = vfloor.f32 %v268
        %v271 = vpack.c.bf16 %v270, %v269
        %v272 = vld [vmem:[%s239] sm:$0xf]
        %v273 = vld [vmem:[%s239 + $0x4] sm:$0xf]
        %v276 = vunpack.c.l.b16 %v272
        %v277 = vunpack.c.l.b16 %v273
        %v278 = vpack.c.b16 %v277, %v276
        %vm280 = vcmask 130048
        %v282 = vsel %vm280, %v271, 0
        %284 = vmatprep.subr.bf16.mxu0 0
        %285 = vmatpush1.bf16.msra.mxu0 0
        %286 = vmatprep.subr.bf16.mxu0 0
        %287 = vmatpush1.bf16.msra.mxu0 0
        %288 = vmatprep.subr.bf16.mxu0 0
        %289 = vmatpush1.bf16.msra.mxu0 0
        %290 = vmatprep.subr.bf16.mxu0 0
        %291 = vmatpush1.bf16.msra.mxu0 0
        %292 = vmatprep.subr.bf16.mxu0 0
        %293 = vmatpush1.bf16.msra.mxu0 0
        %294 = vmatprep.subr.bf16.mxu0 0
        %295 = vmatpush1.bf16.msra.mxu0 0
        %296 = vmatprep.subr.bf16.mxu0 0
        %297 = vmatpush1.bf16.msra.mxu0 0
        %298 = vmatprep.subr.bf16.mxu0 0
        %299 = vmatpush1.bf16.msra.mxu0 %v278
        %300 = vmatprep.subr.bf16.mxu0 0
        %301 = vmatpush2.bf16.msra.mxu0 0
        %302 = vmatprep.subr.bf16.mxu0 0
        %303 = vmatpush2.bf16.msra.mxu0 0
        %304 = vmatprep.subr.bf16.mxu0 0
        %305 = vmatpush2.bf16.msra.mxu0 0
        %306 = vmatprep.subr.bf16.mxu0 0
        %307 = vmatpush2.bf16.msra.mxu0 0
        %308 = vmatprep.subr.bf16.mxu0 0
        %309 = vmatpush2.bf16.msra.mxu0 0
        %310 = vmatprep.subr.bf16.mxu0 0
        %311 = vmatpush2.bf16.msra.mxu0 0
        %312 = vmatprep.subr.bf16.mxu0 0
        %313 = vmatpush2.bf16.msra.mxu0 0
        %314 = vmatprep.subr.bf16.mxu0 0
        %315 = vmatpush2.bf16.msra.mxu0 0
        %316 = vmatprep.mubr.bf16.mxu0 0
        %317 = vmatmul.mubr.bf16.gmra.mxu0 %v282
        %v318 = vpop.f32.mrf.mxu0
        %v319 = vadd.f32 0.0, %v318
        %v320 = vpop.f32.mrf.mxu0
        %v321 = vpop.f32.mrf.mxu0
        %v322 = vadd.f32 0.0, %v321
        %v323 = vpop.f32.mrf.mxu0
        %324 = vdwg.mxu0
        %v325 = vld [vmem:[%s221] sm:$0xff]
        %v326 = vld [vmem:[%s221 + $0x8] sm:$0xff]
        %v327 = vld [vmem:[%s221 + $0x10] sm:$0xff]
        %v328 = vld [vmem:[%s221 + $0x18] sm:$0xff]
        %v329 = vld [vmem:[%s221 + $0x20] sm:$0xff]
        %v330 = vld [vmem:[%s221 + $0x28] sm:$0xff]
        %v331 = vld [vmem:[%s221 + $0x30] sm:$0xff]
        %v332 = vld [vmem:[%s221 + $0x38] sm:$0xff]
        %v333 = vld [vmem:[%s221 + $0x40] sm:$0xff]
        %v334 = vld [vmem:[%s221 + $0x48] sm:$0xff]
        %v335 = vld [vmem:[%s221 + $0x50] sm:$0xff]
        %v336 = vld [vmem:[%s221 + $0x58] sm:$0xff]
        %v337 = vld [vmem:[%s221 + $0x60] sm:$0xff]
        %v338 = vld [vmem:[%s221 + $0x68] sm:$0xff]
        %v339 = vld [vmem:[%s221 + $0x70] sm:$0xff]
        %v340 = vld [vmem:[%s221 + $0x78] sm:$0xff]
        %v341 = vld [vmem:[%s235] sm:$0xf]
        %v342 = vld [vmem:[%s235 + $0x4] sm:$0xf]
        %v343 = vld [vmem:[%s235 + $0x8] sm:$0xf]
        %v344 = vld [vmem:[%s235 + $0xc] sm:$0xf]
        %v345 = vld [vmem:[%s235 + $0x10] sm:$0xf]
        %v346 = vld [vmem:[%s235 + $0x14] sm:$0xf]
        %v347 = vld [vmem:[%s235 + $0x18] sm:$0xf]
        %v348 = vld [vmem:[%s235 + $0x1c] sm:$0xf]
        %v349 = vld [vmem:[%s235 + $0x20] sm:$0xf]
        %v350 = vld [vmem:[%s235 + $0x24] sm:$0xf]
        %v351 = vld [vmem:[%s235 + $0x28] sm:$0xf]
        %v352 = vld [vmem:[%s235 + $0x2c] sm:$0xf]
        %v353 = vld [vmem:[%s235 + $0x30] sm:$0xf]
        %v354 = vld [vmem:[%s235 + $0x34] sm:$0xf]
        %v355 = vld [vmem:[%s235 + $0x38] sm:$0xf]
        %v356 = vld [vmem:[%s235 + $0x3c] sm:$0xf]
        %v357 = vpack.c.bf16 %v322, %v319
        %v374 = vunpack.c.l.b16 %v341
        %v375 = vunpack.c.l.b16 %v342
        %v376 = vunpack.c.l.b16 %v343
        %v377 = vunpack.c.l.b16 %v344
        %v378 = vunpack.c.l.b16 %v345
        %v379 = vunpack.c.l.b16 %v346
        %v380 = vunpack.c.l.b16 %v347
        %v381 = vunpack.c.l.b16 %v348
        %v382 = vunpack.c.l.b16 %v349
        %v383 = vunpack.c.l.b16 %v350
        %v384 = vunpack.c.l.b16 %v351
        %v385 = vunpack.c.l.b16 %v352
        %v386 = vunpack.c.l.b16 %v353
        %v387 = vunpack.c.l.b16 %v354
        %v388 = vunpack.c.l.b16 %v355
        %v389 = vunpack.c.l.b16 %v356
        %v390 = vpack.c.b16 %v375, %v374
        %v391 = vpack.c.b16 %v377, %v376
        %v392 = vpack.c.b16 %v379, %v378
        %v393 = vpack.c.b16 %v381, %v380
        %v394 = vpack.c.b16 %v383, %v382
        %v395 = vpack.c.b16 %v385, %v384
        %v396 = vpack.c.b16 %v387, %v386
        %v397 = vpack.c.b16 %v389, %v388
        %v399 = vsel %vm280, %v390, 0
        %v402 = vsel %vm280, %v391, 0
        %v405 = vsel %vm280, %v392, 0
        %v408 = vsel %vm280, %v393, 0
        %v411 = vsel %vm280, %v394, 0
        %v414 = vsel %vm280, %v395, 0
        %v417 = vsel %vm280, %v396, 0
        %v420 = vsel %vm280, %v397, 0
        %422 = vmatprep.subr.bf16.mxu0 0
        %423 = vmatpush1.bf16.msra.mxu0 0
        %424 = vmatprep.subr.bf16.mxu0 0
        %425 = vmatpush1.bf16.msra.mxu0 0
        %426 = vmatprep.subr.bf16.mxu0 0
        %427 = vmatpush1.bf16.msra.mxu0 0
        %428 = vmatprep.subr.bf16.mxu0 0
        %429 = vmatpush1.bf16.msra.mxu0 0
        %430 = vmatprep.subr.bf16.mxu0 0
        %431 = vmatpush1.bf16.msra.mxu0 0
        %432 = vmatprep.subr.bf16.mxu0 0
        %433 = vmatpush1.bf16.msra.mxu0 0
        %434 = vmatprep.subr.bf16.mxu0 0
        %435 = vmatpush1.bf16.msra.mxu0 0
        %436 = vmatprep.subr.bf16.mxu0 0
        %437 = vmatpush1.bf16.msra.mxu0 %v357
        %438 = vmatprep.subr.bf16.mxu0 0
        %439 = vmatpush2.bf16.msra.mxu0 0
        %440 = vmatprep.subr.bf16.mxu0 0
        %441 = vmatpush2.bf16.msra.mxu0 0
        %442 = vmatprep.subr.bf16.mxu0 0
        %443 = vmatpush2.bf16.msra.mxu0 0
        %444 = vmatprep.subr.bf16.mxu0 0
        %445 = vmatpush2.bf16.msra.mxu0 0
        %446 = vmatprep.subr.bf16.mxu0 0
        %447 = vmatpush2.bf16.msra.mxu0 0
        %448 = vmatprep.subr.bf16.mxu0 0
        %449 = vmatpush2.bf16.msra.mxu0 0
        %450 = vmatprep.subr.bf16.mxu0 0
        %451 = vmatpush2.bf16.msra.mxu0 0
        %452 = vmatprep.subr.bf16.mxu0 0
        %453 = vmatpush2.bf16.msra.mxu0 0
        %454 = vmatprep.mubr.bf16.mxu0 0
        %455 = vmatmul.mubr.bf16.gmra.mxu0 %v399
        %v456 = vpop.f32.mrf.mxu0
        %v457 = vadd.f32 0.0, %v456
        %v458 = vpop.f32.mrf.mxu0
        %v459 = vpop.f32.mrf.mxu0
        %v460 = vadd.f32 0.0, %v459
        %v461 = vpop.f32.mrf.mxu0
        %462 = vmatprep.mubr.bf16.mxu0 0
        %463 = vmatmul.mubr.bf16.gmra.mxu0 %v402
        %v464 = vpop.f32.mrf.mxu0
        %v465 = vadd.f32 0.0, %v464
        %v466 = vpop.f32.mrf.mxu0
        %v467 = vpop.f32.mrf.mxu0
        %v468 = vadd.f32 0.0, %v467
        %v469 = vpop.f32.mrf.mxu0
        %470 = vmatprep.mubr.bf16.mxu0 0
        %471 = vmatmul.mubr.bf16.gmra.mxu0 %v405
        %v472 = vpop.f32.mrf.mxu0
        %v473 = vadd.f32 0.0, %v472
        %v474 = vpop.f32.mrf.mxu0
        %v475 = vpop.f32.mrf.mxu0
        %v476 = vadd.f32 0.0, %v475
        %v477 = vpop.f32.mrf.mxu0
        %478 = vmatprep.mubr.bf16.mxu0 0
        %479 = vmatmul.mubr.bf16.gmra.mxu0 %v408
        %v480 = vpop.f32.mrf.mxu0
        %v481 = vadd.f32 0.0, %v480
        %v482 = vpop.f32.mrf.mxu0
        %v483 = vpop.f32.mrf.mxu0
        %v484 = vadd.f32 0.0, %v483
        %v485 = vpop.f32.mrf.mxu0
        %486 = vmatprep.mubr.bf16.mxu0 0
        %487 = vmatmul.mubr.bf16.gmra.mxu0 %v411
        %v488 = vpop.f32.mrf.mxu0
        %v489 = vadd.f32 0.0, %v488
        %v490 = vpop.f32.mrf.mxu0
        %v491 = vpop.f32.mrf.mxu0
        %v492 = vadd.f32 0.0, %v491
        %v493 = vpop.f32.mrf.mxu0
        %494 = vmatprep.mubr.bf16.mxu0 0
        %495 = vmatmul.mubr.bf16.gmra.mxu0 %v414
        %v496 = vpop.f32.mrf.mxu0
        %v497 = vadd.f32 0.0, %v496
        %v498 = vpop.f32.mrf.mxu0
        %v499 = vpop.f32.mrf.mxu0
        %v500 = vadd.f32 0.0, %v499
        %v501 = vpop.f32.mrf.mxu0
        %502 = vmatprep.mubr.bf16.mxu0 0
        %503 = vmatmul.mubr.bf16.gmra.mxu0 %v417
        %v504 = vpop.f32.mrf.mxu0
        %v505 = vadd.f32 0.0, %v504
        %v506 = vpop.f32.mrf.mxu0
        %v507 = vpop.f32.mrf.mxu0
        %v508 = vadd.f32 0.0, %v507
        %v509 = vpop.f32.mrf.mxu0
        %510 = vmatprep.mubr.bf16.mxu0 0
        %511 = vmatmul.mubr.bf16.gmra.mxu0 %v420
        %v512 = vpop.f32.mrf.mxu0
        %v513 = vadd.f32 0.0, %v512
        %v514 = vpop.f32.mrf.mxu0
        %v515 = vpop.f32.mrf.mxu0
        %v516 = vadd.f32 0.0, %v515
        %v517 = vpop.f32.mrf.mxu0
        %518 = vdwg.mxu0
        %v519 = vadd.f32 %v325, %v457
        %v520 = vadd.f32 %v326, %v460
        %v521 = vadd.f32 %v327, %v465
        %v522 = vadd.f32 %v328, %v468
        %v523 = vadd.f32 %v329, %v473
        %v524 = vadd.f32 %v330, %v476
        %v525 = vadd.f32 %v331, %v481
        %v526 = vadd.f32 %v332, %v484
        %v527 = vadd.f32 %v333, %v489
        %v528 = vadd.f32 %v334, %v492
        %v529 = vadd.f32 %v335, %v497
        %v530 = vadd.f32 %v336, %v500
        %v531 = vadd.f32 %v337, %v505
        %v532 = vadd.f32 %v338, %v508
        %v533 = vadd.f32 %v339, %v513
        %v534 = vadd.f32 %v340, %v516
        %535 = vst [vmem:[%s221] sm:$0xff] %v519
        %536 = vst [vmem:[%s221 + $0x8] sm:$0xff] %v520
        %537 = vst [vmem:[%s221 + $0x10] sm:$0xff] %v521
        %538 = vst [vmem:[%s221 + $0x18] sm:$0xff] %v522
        %539 = vst [vmem:[%s221 + $0x20] sm:$0xff] %v523
        %540 = vst [vmem:[%s221 + $0x28] sm:$0xff] %v524
        %541 = vst [vmem:[%s221 + $0x30] sm:$0xff] %v525
        %542 = vst [vmem:[%s221 + $0x38] sm:$0xff] %v526
        %543 = vst [vmem:[%s221 + $0x40] sm:$0xff] %v527
        %544 = vst [vmem:[%s221 + $0x48] sm:$0xff] %v528
        %545 = vst [vmem:[%s221 + $0x50] sm:$0xff] %v529
        %546 = vst [vmem:[%s221 + $0x58] sm:$0xff] %v530
        %547 = vst [vmem:[%s221 + $0x60] sm:$0xff] %v531
        %548 = vst [vmem:[%s221 + $0x68] sm:$0xff] %v532
        %549 = vst [vmem:[%s221 + $0x70] sm:$0xff] %v533
        %550 = vst [vmem:[%s221 + $0x78] sm:$0xff] %v534
        // Predicated region
        $region37: #{tpu_custom_call.1} parent=31 // pred_check
          %p551 = pneg %p241
        $region38: #{tpu_custom_call.1} parent=31 // pred_check_branch
          %553 = sbr.rel (%p551) target = $region40
        $region39: #{tpu_custom_call.1} parent=31 // pred_region
          %v554 = vld [vmem:[%s221] sm:$0xff]
          %v555 = vld [vmem:[%s221 + $0x8] sm:$0xff]
          %v556 = vld [vmem:[%s221 + $0x10] sm:$0xff]
          %v557 = vld [vmem:[%s221 + $0x18] sm:$0xff]
          %v558 = vld [vmem:[%s221 + $0x20] sm:$0xff]
          %v559 = vld [vmem:[%s221 + $0x28] sm:$0xff]
          %v560 = vld [vmem:[%s221 + $0x30] sm:$0xff]
          %v561 = vld [vmem:[%s221 + $0x38] sm:$0xff]
          %v562 = vld [vmem:[%s221 + $0x40] sm:$0xff]
          %v563 = vld [vmem:[%s221 + $0x48] sm:$0xff]
          %v564 = vld [vmem:[%s221 + $0x50] sm:$0xff]
          %v565 = vld [vmem:[%s221 + $0x58] sm:$0xff]
          %v566 = vld [vmem:[%s221 + $0x60] sm:$0xff]
          %v567 = vld [vmem:[%s221 + $0x68] sm:$0xff]
          %v568 = vld [vmem:[%s221 + $0x70] sm:$0xff]
          %v569 = vld [vmem:[%s221 + $0x78] sm:$0xff]
          %v570 = vmul.f32 %v554, 0.003921569
          %v571 = vmul.f32 %v555, 0.003921569
          %v572 = vmul.f32 %v556, 0.003921569
          %v573 = vmul.f32 %v557, 0.003921569
          %v574 = vmul.f32 %v558, 0.003921569
          %v575 = vmul.f32 %v559, 0.003921569
          %v576 = vmul.f32 %v560, 0.003921569
          %v577 = vmul.f32 %v561, 0.003921569
          %v578 = vmul.f32 %v562, 0.003921569
          %v579 = vmul.f32 %v563, 0.003921569
          %v580 = vmul.f32 %v564, 0.003921569
          %v581 = vmul.f32 %v565, 0.003921569
          %v582 = vmul.f32 %v566, 0.003921569
          %v583 = vmul.f32 %v567, 0.003921569
          %v584 = vmul.f32 %v568, 0.003921569
          %v585 = vmul.f32 %v569, 0.003921569
          %586 = vst [vmem:[%s221] sm:$0xff] %v570
          %587 = vst [vmem:[%s221 + $0x8] sm:$0xff] %v571
          %588 = vst [vmem:[%s221 + $0x10] sm:$0xff] %v572
          %589 = vst [vmem:[%s221 + $0x18] sm:$0xff] %v573
          %590 = vst [vmem:[%s221 + $0x20] sm:$0xff] %v574
          %591 = vst [vmem:[%s221 + $0x28] sm:$0xff] %v575
          %592 = vst [vmem:[%s221 + $0x30] sm:$0xff] %v576
          %593 = vst [vmem:[%s221 + $0x38] sm:$0xff] %v577
          %594 = vst [vmem:[%s221 + $0x40] sm:$0xff] %v578
          %595 = vst [vmem:[%s221 + $0x48] sm:$0xff] %v579
          %596 = vst [vmem:[%s221 + $0x50] sm:$0xff] %v580
          %597 = vst [vmem:[%s221 + $0x58] sm:$0xff] %v581
          %598 = vst [vmem:[%s221 + $0x60] sm:$0xff] %v582
          %599 = vst [vmem:[%s221 + $0x68] sm:$0xff] %v583
          %600 = vst [vmem:[%s221 + $0x70] sm:$0xff] %v584
          %601 = vst [vmem:[%s221 + $0x78] sm:$0xff] %v585
        $region40: #{tpu_custom_call.1} parent=31 // pred_fallthru
          _
        %s602 = sand.u32 %s126, 1
        %s603 = scalar_lea.sflag [#allocation3], %s602
        %s604 = sand.u32 %s126, 1
        %s605 = smul.addr %s604, 128
        %s606 = scalar_lea.vmem [#allocation2], %s605
        // Predicated region
        $region41: #{tpu_custom_call.1} parent=31 // pred_check
          %p607 = pneg %p136
        $region42: #{tpu_custom_call.1} parent=31 // pred_check_branch
          %609 = sbr.rel (%p607) target = $region44
        $region43: #{tpu_custom_call.1} parent=31 // pred_region
          %s611 = ssub.s32 2048, 2048
          %612 = vsyncadd %s603, %s611
          %s613 = smul.addr %s22, 16
          %s614 = sadd.s32 %s23, %s613
          %s615 = smul.addr %s614, 128
          %s616 = scalar_lea.hbm %s3, %s615
          %s617 = sshll.u32 %s606, 4
          %s618 = int_to_ptr.vmem [resolvable:$true] %s617
          %623 = dma.vmem_to_hbm [thread:$0]  %s618, 2048, %s616, %s603, 128, 128, 8
        $region44: #{tpu_custom_call.1} parent=31 // pred_fallthru
          _
      $region32: #{tpu_custom_call.1} parent=5 // pred_fallthru
        _
      %p624 = scmp.le.s32.totalorder 2, %s12
      // Predicated region
      $region45: #{tpu_custom_call.1} parent=5 // pred_check
        %p625 = pneg %p624
      $region46: #{tpu_custom_call.1} parent=5 // pred_check_branch
        %627 = sbr.rel (%p625) target = $region48
      $region47: #{tpu_custom_call.1} parent=5 // pred_region
        %s628 = ssub.s32 %s12, 2
        // Predicated region
        $region49: #{tpu_custom_call.1} parent=47 // pred_check
          %p629 = pneg %p142
        $region50: #{tpu_custom_call.1} parent=47 // pred_check_branch
          %631 = sbr.rel (%p629) target = $region52
        $region51: #{tpu_custom_call.1} parent=47 // pred_region
          %s632 = sand.u32 %s127, 1
          %s633 = scalar_lea.sflag [#allocation3], %s632
          %s634 = sand.u32 %s127, 1
          %s635 = smul.addr %s634, 128
          %s636 = scalar_lea.vmem [#allocation2], %s635
          %637 = dma.done %s633, 2048
        $region52: #{tpu_custom_call.1} parent=47 // pred_fallthru
          _
      $region48: #{tpu_custom_call.1} parent=5 // pred_fallthru
        _
    $region6: #{tpu_custom_call.1} parent=1 // loop_footer
      %s16 = sadd.s32 1, %s12
    $region7: #{tpu_custom_call.1} parent=1 // loop_footer_branch
      %11 = sbr.rel target = $region3
    $region8: #{tpu_custom_call.1} parent=1 // loop_exit
      _
    %638 = vsyncpa [#allocation3], 1
    %s639 = scalar_lea.sflag [#allocation3], 1
    %640 = vsyncpa %s639, 1

</llo_original>
